<compile_context>
chip_gen: v5e
topology: v5e:2x2
jax: 0.10.0
libtpu: 0.0.40
codegen_flags: <defaults>
</compile_context>

<pallas_src>
import math

import jax
import jax.numpy as jnp
from jax import lax
from jax.experimental import pallas as pl
from jax.experimental.pallas import tpu as pltpu

EPS = 1e-5  # PyTorch BatchNorm default eps


# ------------------------------ fused kernel --------------------------------


def make_kernel(B, BP, L2, L4, C1, C2):
    """B: real batch per group, BP: batch padded to a multiple of 8."""
    BL2 = BP * L2  # rows per group after pool1, ordered (position, batch)

    def kernel(xe_ref, xo_ref, w1_ref, c1_ref, w2_ref, c2_ref, w1p_ref, c3_ref,
               wq_ref, bq_ref, wk_ref, bk_ref, wv_ref, bv_ref, wo_ref, bo_ref,
               out_ref, p1pad_ref):
        f32 = jnp.float32
        bf16 = jnp.bfloat16
        H = c3_ref.shape[1]

        # ---- conv1 (Cin=1,k=3,pad=1) + BN1 + ReLU + MaxPool1d(2) -------------
        # Even/odd output positions evaluated separately (shared bias), pooled
        # with one elementwise max before the (monotone) ReLU.
        ye = jnp.dot(xe_ref[...], w1_ref[...], preferred_element_type=f32)
        yo = jnp.dot(xo_ref[...], w1_ref[...], preferred_element_type=f32)
        p1 = jnp.maximum(jnp.maximum(ye, yo) + c1_ref[...], 0.0)   # (BL2, C1)

        # ---- conv2 (k=3,pad=1) + BN2 + ReLU: one K=96 matmul -----------------
        # Rows are (position, batch): a +-1 position shift is a +-BP row shift
        # (sublane aligned) and never crosses a batch boundary.  Only the 2*BP
        # pad rows are zeroed; the middle store and the three window reads are
        # all aligned static slices.
        zrows = jnp.zeros((BP, C1), f32)
        p1pad_ref[pl.ds(0, BP), :] = zrows
        p1pad_ref[pl.ds(BP + BL2, BP), :] = zrows
        p1pad_ref[pl.ds(BP, BL2), :] = p1
        conv2_in = jnp.concatenate(
            [p1pad_ref[pl.ds(0, BL2), :],
             p1pad_ref[pl.ds(BP, BL2), :],
             p1pad_ref[pl.ds(2 * BP, BL2), :]], axis=-1)           # (BL2, 96)
        y2 = jnp.dot(conv2_in.astype(bf16), w2_ref[...],
                     preferred_element_type=f32)
        y2 = jnp.maximum(y2 + c2_ref[...], 0.0)                    # (BL2, C2)

        # ---- MaxPool1d(2) fused into fc1 + BN3 + ReLU: one K=L4*C2 matmul ----
        pooled = [jnp.maximum(y2[(2 * m) * BP:(2 * m + 1) * BP, :],
                              y2[(2 * m + 1) * BP:(2 * m + 2) * BP, :])
                  for m in range(L4)]
        z = jnp.concatenate(pooled, axis=-1)                       # (BP, L4*C2)
        h = jnp.dot(z.astype(bf16), w1p_ref[...], preferred_element_type=f32)
        h = jnp.maximum(h + c3_ref[...], 0.0)                      # (BP, H)
        # Dropout(0.2) is the identity in eval mode.

        # ---- Attention across this group's batch rows ------------------------
        hb = h.astype(bf16)
        q = jnp.dot(hb, wq_ref[...], preferred_element_type=f32) + bq_ref[...]
        k_ = jnp.dot(hb, wk_ref[...], preferred_element_type=f32) + bk_ref[...]
        v = jnp.dot(hb, wv_ref[...], preferred_element_type=f32) + bv_ref[...]
        s = jnp.einsum('ih,jh->ij', q, k_,
                       preferred_element_type=f32) * (1.0 / math.sqrt(H))
        # Mask padded batch rows out of the keys so softmax only sees real rows.
        kidx = lax.broadcasted_iota(jnp.int32, (BP, BP), 1)
        s = jnp.where(kidx < B, s, -1e30)
        s = s - jnp.max(s, axis=-1, keepdims=True)
        e = jnp.exp(s)
        attw = e * pl.reciprocal(jnp.sum(e, axis=-1, keepdims=True), approx=True)
        att = jnp.dot(attw, v, preferred_element_type=f32)         # (BP, H)

        logits = (jnp.dot(att.astype(bf16), wo_ref[...],
                          preferred_element_type=f32) + bo_ref[...])
        out_ref[...] = 1.0 / (1.0 + jnp.exp(-logits))              # exact sigmoid

    return kernel


# --------------------------- pallas_call wrapper -----------------------------


def cnn_attention_forward(x, prep):
    """x: (G, B, L) float32 -- G independent requests, each a batch of B rows.
    Returns (G, B, output_size) sigmoid probabilities."""
    G, B, L = x.shape
    BP = ((B + 7) // 8) * 8
    L2, L4 = L // 2, L // 4
    C1 = prep['w1'].shape[1]
    C2 = prep['w2'].shape[1]
    O = prep['bo'].shape[1]
    BL2 = BP * L2

    # Glue (hoisted): even/odd im2col taps for conv1, rows ordered
    # (position, batch) over the zero-padded batch.  Lane-dense (rows, 3) layout.
    xb = jnp.pad(x, ((0, 0), (0, BP - B), (1, 1)))                 # (G, BP, L+2)

    def taps(base):
        cols = jnp.stack([xb[:, :, base + k: base + k + 2 * L2: 2]
                          for k in range(3)], axis=-1)             # (G, BP, L2, 3)
        return (jnp.transpose(cols, (0, 2, 1, 3))
                .reshape(G, BL2, 3).astype(jnp.bfloat16))

    xe = taps(0)   # even output positions 2m   -> input taps 2m-1, 2m, 2m+1
    xo = taps(1)   # odd  output positions 2m+1 -> input taps 2m, 2m+1, 2m+2

    params = (prep['w1'], prep['c1'], prep['w2'], prep['c2'], prep['w1p'],
              prep['c3'], prep['wq'], prep['bq'], prep['wk'], prep['bk'],
              prep['wv'], prep['bv'], prep['wo'], prep['bo'])

    def group_spec(shape):
        nd = len(shape)
        return pl.BlockSpec((None,) + tuple(shape[1:]),
                            lambda g, nd=nd: (g,) + (0,) * (nd - 1))

    def const_spec(shape):
        nd = len(shape)
        return pl.BlockSpec(tuple(shape), lambda g, nd=nd: (0,) * nd)

    kernel = make_kernel(B, BP, L2, L4, C1, C2)

    out = pl.pallas_call(
        kernel,
        grid=(G,),
        in_specs=[group_spec(xe.shape), group_spec(xo.shape)]
                 + [const_spec(p.shape) for p in params],
        out_specs=group_spec((G, BP, O)),
        out_shape=jax.ShapeDtypeStruct((G, BP, O), jnp.float32),
        scratch_shapes=[pltpu.VMEM((BL2 + 2 * BP, C1), jnp.float32)],  # padded p1
        compiler_params=pltpu.CompilerParams(
            dimension_semantics=("parallel",),      # groups are independent
            vmem_limit_bytes=32 * 1024 * 1024),
    )(xe, xo, *params)
    return out[:, :B, :]


# --------------------- one-time parameter preprocessing ----------------------


def _bn_fold(g, b, m, v):
    scale = g / jnp.sqrt(v + EPS)
    shift = b - m * scale
    return scale, shift


def prepare_params(p):
    """Fold BN affines into weights/biases, pre-permute for the kernel's lane
    layouts, and cast MXU weight operands to bf16 (done once, hoisted)."""
    C1 = p['conv1_w'].shape[0]                    # 32
    C2 = p['conv2_w'].shape[0]                    # 64
    H = p['fc1_w'].shape[0]
    O = p['fc2_w'].shape[0]
    L4 = p['fc1_w'].shape[1] // C2
    bf = jnp.bfloat16

    s1, t1 = _bn_fold(p['bn1_g'], p['bn1_b'], p['bn1_m'], p['bn1_v'])
    w1 = (p['conv1_w'][:, 0, :] * s1[:, None]).T                    # (3, C1)
    c1 = (s1 * p['conv1_b'] + t1).reshape(1, C1)

    s2, t2 = _bn_fold(p['bn2_g'], p['bn2_b'], p['bn2_m'], p['bn2_v'])
    # (C2, C1, 3) -> (3, C1, C2) -> (96, C2); lanes [k*C1 + c] match conv2_in.
    w2 = (jnp.transpose(p['conv2_w'], (2, 1, 0)) * s2[None, None, :]
          ).reshape(3 * C1, C2)
    c2 = (s2 * p['conv2_b'] + t2).reshape(1, C2)

    s3, t3 = _bn_fold(p['bn3_g'], p['bn3_b'], p['bn3_m'], p['bn3_v'])
    # PyTorch flattens (B, C2, L4) channel-major (col = c*L4 + m); the kernel's
    # pooled z uses col = m*C2 + c, so re-permute fc1_w once here.
    w1p = (jnp.transpose(p['fc1_w'].reshape(H, C2, L4), (2, 1, 0))
           .reshape(L4 * C2, H) * s3[None, :])
    c3 = (s3 * p['fc1_b'] + t3).reshape(1, H)

    return dict(
        w1=w1.astype(bf), c1=c1, w2=w2.astype(bf), c2=c2,
        w1p=w1p.astype(bf), c3=c3,
        wq=p['q_w'].T.astype(bf), bq=p['q_b'].reshape(1, H),
        wk=p['k_w'].T.astype(bf), bk=p['k_b'].reshape(1, H),
        wv=p['v_w'].T.astype(bf), bv=p['v_b'].reshape(1, H),
        wo=p['fc2_w'].T.astype(bf), bo=p['fc2_b'].reshape(1, O),
    )


# --------------------------- deterministic init ------------------------------


def init_params(key, input_size, hidden_size, output_size):
    ks = jax.random.split(key, 26)
    nrm = lambda k, shape, s=0.1: s * jax.random.normal(k, shape, jnp.float32)
    fc_in = 64 * (input_size // 4)
    return {
        'conv1_w': nrm(ks[0], (32, 1, 3)),  'conv1_b': nrm(ks[1], (32,)),
        'bn1_g': 1.0 + nrm(ks[2], (32,)),   'bn1_b': nrm(ks[3], (32,)),
        'bn1_m': nrm(ks[4], (32,)),         'bn1_v': 1.0 + jnp.abs(nrm(ks[5], (32,))),
        'conv2_w': nrm(ks[6], (64, 32, 3)), 'conv2_b': nrm(ks[7], (64,)),
        'bn2_g': 1.0 + nrm(ks[8], (64,)),   'bn2_b': nrm(ks[9], (64,)),
        'bn2_m': nrm(ks[10], (64,)),        'bn2_v': 1.0 + jnp.abs(nrm(ks[11], (64,))),
        'fc1_w': nrm(ks[12], (hidden_size, fc_in)), 'fc1_b': nrm(ks[13], (hidden_size,)),
        'bn3_g': 1.0 + nrm(ks[14], (hidden_size,)), 'bn3_b': nrm(ks[15], (hidden_size,)),
        'bn3_m': nrm(ks[16], (hidden_size,)),
        'bn3_v': 1.0 + jnp.abs(nrm(ks[17], (hidden_size,))),
        'q_w': nrm(ks[18], (hidden_size, hidden_size)), 'q_b': nrm(ks[19], (hidden_size,)),
        'k_w': nrm(ks[20], (hidden_size, hidden_size)), 'k_b': nrm(ks[21], (hidden_size,)),
        'v_w': nrm(ks[22], (hidden_size, hidden_size)), 'v_b': nrm(ks[23], (hidden_size,)),
        'fc2_w': nrm(ks[24], (output_size, hidden_size)), 'fc2_b': nrm(ks[25], (output_size,)),
    }


# --------------------------- pure-JAX reference ------------------------------


def _conv1d_ref(x, w, b):  # x (B,Cin,L), w (Cout,Cin,3), pad=1
    L = x.shape[2]
    xp = jnp.pad(x, ((0, 0), (0, 0), (1, 1)))
    out = jnp.zeros((x.shape[0], w.shape[0], L), jnp.float32)
    for k in range(3):
        out = out + jnp.einsum('bcl,oc->bol', xp[:, :, k:k + L], w[:, :, k])
    return out + b[None, :, None]


def _bn_ref(x, g, b, m, v, axis):
    sh = [1] * x.ndim
    sh[axis] = -1
    return (x - m.reshape(sh)) / jnp.sqrt(v.reshape(sh) + EPS) * g.reshape(sh) + b.reshape(sh)


def reference_forward(x, p):
    B, L = x.shape
    H = p['fc1_w'].shape[0]
    y = _conv1d_ref(x[:, None, :], p['conv1_w'], p['conv1_b'])
    y = jnp.maximum(_bn_ref(y, p['bn1_g'], p['bn1_b'], p['bn1_m'], p['bn1_v'], 1), 0.0)
    y = y.reshape(B, 32, L // 2, 2).max(-1)
    y = _conv1d_ref(y, p['conv2_w'], p['conv2_b'])
    y = jnp.maximum(_bn_ref(y, p['bn2_g'], p['bn2_b'], p['bn2_m'], p['bn2_v'], 1), 0.0)
    y = y.reshape(B, 64, L // 4, 2).max(-1)
    flat = y.reshape(B, -1)
    h = flat @ p['fc1_w'].T + p['fc1_b']
    h = jnp.maximum(_bn_ref(h, p['bn3_g'], p['bn3_b'], p['bn3_m'], p['bn3_v'], 1), 0.0)
    q = h @ p['q_w'].T + p['q_b']
    k = h @ p['k_w'].T + p['k_b']
    v = h @ p['v_w'].T + p['v_b']
    s = (q @ k.T) / jnp.sqrt(jnp.float32(H))
    w = jax.nn.softmax(s, axis=-1)
    a = w @ v
    return jax.nn.sigmoid(a @ p['fc2_w'].T + p['fc2_b'])


# ------------------------------------ main -----------------------------------


if __name__ == "__main__":
    input_size, hidden_size, output_size = 16, 32, 4
    G, batch = 4, 2                       # 4 independent requests, batch=2 each
    key = jax.random.PRNGKey(0)
    pkey, xkey = jax.random.split(key)
    params = init_params(pkey, input_size, hidden_size, output_size)
    x = jax.random.normal(xkey, (G, batch, input_size), jnp.float32)

    prep = prepare_params(params)                       # hoisted, param-only
    fwd = jax.jit(cnn_attention_forward)
    out = jax.block_until_ready(fwd(x, prep))

    ref = jnp.stack([reference_forward(x[g], params) for g in range(G)], axis=0)
    assert out.shape == (G, batch, output_size)
    # Tolerance covers bf16 MXU operands and the approx-EUP softmax reciprocal;
    # structural errors would be O(0.1) on sigmoid outputs.
    assert bool(jnp.allclose(out, ref, atol=3e-2, rtol=3e-2)), (out, ref)
    print("KERNEL_OK")
</pallas_src>

<mosaic_0001>
module attributes {stable_mosaic.version = 11 : i64} {
  func.func @kernel(%arg0: i32, %arg1: memref<1x64x3xbf16, #tpu.memory_space<vmem>>, %arg2: memref<1x64x3xbf16, #tpu.memory_space<vmem>>, %arg3: memref<3x32xbf16, #tpu.memory_space<vmem>>, %arg4: memref<1x32xf32, #tpu.memory_space<vmem>>, %arg5: memref<96x64xbf16, #tpu.memory_space<vmem>>, %arg6: memref<1x64xf32, #tpu.memory_space<vmem>>, %arg7: memref<256x32xbf16, #tpu.memory_space<vmem>>, %arg8: memref<1x32xf32, #tpu.memory_space<vmem>>, %arg9: memref<32x32xbf16, #tpu.memory_space<vmem>>, %arg10: memref<1x32xf32, #tpu.memory_space<vmem>>, %arg11: memref<32x32xbf16, #tpu.memory_space<vmem>>, %arg12: memref<1x32xf32, #tpu.memory_space<vmem>>, %arg13: memref<32x32xbf16, #tpu.memory_space<vmem>>, %arg14: memref<1x32xf32, #tpu.memory_space<vmem>>, %arg15: memref<32x4xbf16, #tpu.memory_space<vmem>>, %arg16: memref<1x4xf32, #tpu.memory_space<vmem>>, %arg17: memref<1x8x4xf32, #tpu.memory_space<vmem>>, %arg18: memref<80x32xf32, #tpu.memory_space<vmem>>) attributes {dimension_semantics = [#tpu.dimension_semantics<parallel>], iteration_bounds = array<i64: 4>, scalar_prefetch = 0 : i64, scratch_operands = 1 : i64, tpu.core_type = #tpu.core_type<tc>, window_params = [{transform_indices = @transform_0, window_bounds = array<i64: 1, 64, 3>}, {transform_indices = @transform_1, window_bounds = array<i64: 1, 64, 3>}, {pipeline_mode = #tpu.pipeline_mode<synchronous>, transform_indices = @transform_2, window_bounds = array<i64: 3, 32>}, {pipeline_mode = #tpu.pipeline_mode<synchronous>, transform_indices = @transform_3, window_bounds = array<i64: 1, 32>}, {pipeline_mode = #tpu.pipeline_mode<synchronous>, transform_indices = @transform_4, window_bounds = array<i64: 96, 64>}, {pipeline_mode = #tpu.pipeline_mode<synchronous>, transform_indices = @transform_5, window_bounds = array<i64: 1, 64>}, {pipeline_mode = #tpu.pipeline_mode<synchronous>, transform_indices = @transform_6, window_bounds = array<i64: 256, 32>}, {pipeline_mode = #tpu.pipeline_mode<synchronous>, transform_indices = @transform_7, window_bounds = array<i64: 1, 32>}, {pipeline_mode = #tpu.pipeline_mode<synchronous>, transform_indices = @transform_8, window_bounds = array<i64: 32, 32>}, {pipeline_mode = #tpu.pipeline_mode<synchronous>, transform_indices = @transform_9, window_bounds = array<i64: 1, 32>}, {pipeline_mode = #tpu.pipeline_mode<synchronous>, transform_indices = @transform_10, window_bounds = array<i64: 32, 32>}, {pipeline_mode = #tpu.pipeline_mode<synchronous>, transform_indices = @transform_11, window_bounds = array<i64: 1, 32>}, {pipeline_mode = #tpu.pipeline_mode<synchronous>, transform_indices = @transform_12, window_bounds = array<i64: 32, 32>}, {pipeline_mode = #tpu.pipeline_mode<synchronous>, transform_indices = @transform_13, window_bounds = array<i64: 1, 32>}, {pipeline_mode = #tpu.pipeline_mode<synchronous>, transform_indices = @transform_14, window_bounds = array<i64: 32, 4>}, {pipeline_mode = #tpu.pipeline_mode<synchronous>, transform_indices = @transform_15, window_bounds = array<i64: 1, 4>}, {transform_indices = @transform_16, window_bounds = array<i64: 1, 8, 4>}]} {
    %c0 = arith.constant 0 : index
    %c0_0 = arith.constant 0 : index
    %c0_1 = arith.constant 0 : index
    %0 = vector.load %arg1[%c0, %c0_0, %c0_1] : memref<1x64x3xbf16, #tpu.memory_space<vmem>>, vector<1x64x3xbf16>
    %1 = vector.shape_cast %0 : vector<1x64x3xbf16> to vector<64x3xbf16>
    %c0_2 = arith.constant 0 : index
    %c0_3 = arith.constant 0 : index
    %2 = vector.load %arg3[%c0_2, %c0_3] : memref<3x32xbf16, #tpu.memory_space<vmem>>, vector<3x32xbf16>
    %cst = arith.constant dense<0.000000e+00> : vector<64x32xf32>
    %3 = tpu.matmul %1, %2, %cst {dimension_numbers = #tpu.dot_dimension_numbers<[1], [0], [0], [1], [0, 0, 1, 1], [], []>} : vector<64x3xbf16>, vector<3x32xbf16>, vector<64x32xf32> -> vector<64x32xf32>
    %c0_4 = arith.constant 0 : index
    %c0_5 = arith.constant 0 : index
    %c0_6 = arith.constant 0 : index
    %4 = vector.load %arg2[%c0_4, %c0_5, %c0_6] : memref<1x64x3xbf16, #tpu.memory_space<vmem>>, vector<1x64x3xbf16>
    %5 = vector.shape_cast %4 : vector<1x64x3xbf16> to vector<64x3xbf16>
    %c0_7 = arith.constant 0 : index
    %c0_8 = arith.constant 0 : index
    %6 = vector.load %arg3[%c0_7, %c0_8] : memref<3x32xbf16, #tpu.memory_space<vmem>>, vector<3x32xbf16>
    %cst_9 = arith.constant dense<0.000000e+00> : vector<64x32xf32>
    %7 = tpu.matmul %5, %6, %cst_9 {dimension_numbers = #tpu.dot_dimension_numbers<[1], [0], [0], [1], [0, 0, 1, 1], [], []>} : vector<64x3xbf16>, vector<3x32xbf16>, vector<64x32xf32> -> vector<64x32xf32>
    %8 = arith.maximumf %3, %7 : vector<64x32xf32>
    %c0_10 = arith.constant 0 : index
    %c0_11 = arith.constant 0 : index
    %9 = vector.load %arg4[%c0_10, %c0_11] : memref<1x32xf32, #tpu.memory_space<vmem>>, vector<1x32xf32>
    %10 = vector.broadcast %9 : vector<1x32xf32> to vector<64x32xf32>
    %11 = arith.addf %8, %10 : vector<64x32xf32>
    %cst_12 = arith.constant 0.000000e+00 : f32
    %12 = vector.broadcast %cst_12 : f32 to vector<64x32xf32>
    %13 = arith.maximumf %11, %12 : vector<64x32xf32>
    %cst_13 = arith.constant 0.000000e+00 : f32
    %14 = vector.broadcast %cst_13 : f32 to vector<8x32xf32>
    %c0_14 = arith.constant 0 : index
    %c0_15 = arith.constant 0 : index
    %15 = vector.load %arg18[%c0_14, %c0_15] : memref<80x32xf32, #tpu.memory_space<vmem>>, vector<8x32xf32>
    tpu.vector_store %arg18[%c0_14, %c0_15], %14 {strides = array<i32>} : memref<80x32xf32, #tpu.memory_space<vmem>>, vector<8x32xf32>,
    %c72 = arith.constant 72 : index
    %c0_16 = arith.constant 0 : index
    %16 = vector.load %arg18[%c72, %c0_16] : memref<80x32xf32, #tpu.memory_space<vmem>>, vector<8x32xf32>
    tpu.vector_store %arg18[%c72, %c0_16], %14 {strides = array<i32>} : memref<80x32xf32, #tpu.memory_space<vmem>>, vector<8x32xf32>,
    %c8 = arith.constant 8 : index
    %c0_17 = arith.constant 0 : index
    %17 = vector.load %arg18[%c8, %c0_17] : memref<80x32xf32, #tpu.memory_space<vmem>>, vector<64x32xf32>
    tpu.vector_store %arg18[%c8, %c0_17], %13 {strides = array<i32>} : memref<80x32xf32, #tpu.memory_space<vmem>>, vector<64x32xf32>,
    %c0_18 = arith.constant 0 : index
    %c0_19 = arith.constant 0 : index
    %18 = vector.load %arg18[%c0_18, %c0_19] : memref<80x32xf32, #tpu.memory_space<vmem>>, vector<64x32xf32>
    %c8_20 = arith.constant 8 : index
    %c0_21 = arith.constant 0 : index
    %19 = vector.load %arg18[%c8_20, %c0_21] : memref<80x32xf32, #tpu.memory_space<vmem>>, vector<64x32xf32>
    %c16 = arith.constant 16 : index
    %c0_22 = arith.constant 0 : index
    %20 = vector.load %arg18[%c16, %c0_22] : memref<80x32xf32, #tpu.memory_space<vmem>>, vector<64x32xf32>
    %21 = tpu.concatenate %18, %19, %20 in 1 : vector<64x32xf32>, vector<64x32xf32>, vector<64x32xf32> -> vector<64x96xf32>
    %22 = arith.truncf %21 : vector<64x96xf32> to vector<64x96xbf16>
    %c0_23 = arith.constant 0 : index
    %c0_24 = arith.constant 0 : index
    %23 = vector.load %arg5[%c0_23, %c0_24] : memref<96x64xbf16, #tpu.memory_space<vmem>>, vector<96x64xbf16>
    %cst_25 = arith.constant dense<0.000000e+00> : vector<64x64xf32>
    %24 = tpu.matmul %22, %23, %cst_25 {dimension_numbers = #tpu.dot_dimension_numbers<[1], [0], [0], [1], [0, 0, 1, 1], [], []>} : vector<64x96xbf16>, vector<96x64xbf16>, vector<64x64xf32> -> vector<64x64xf32>
    %c0_26 = arith.constant 0 : index
    %c0_27 = arith.constant 0 : index
    %25 = vector.load %arg6[%c0_26, %c0_27] : memref<1x64xf32, #tpu.memory_space<vmem>>, vector<1x64xf32>
    %26 = vector.broadcast %25 : vector<1x64xf32> to vector<64x64xf32>
    %27 = arith.addf %24, %26 : vector<64x64xf32>
    %cst_28 = arith.constant 0.000000e+00 : f32
    %28 = vector.broadcast %cst_28 : f32 to vector<64x64xf32>
    %29 = arith.maximumf %27, %28 : vector<64x64xf32>
    %30 = vector.extract_strided_slice %29 {offsets = [0, 0], sizes = [8, 64], strides = [1, 1]} : vector<64x64xf32> to vector<8x64xf32>
    %31 = vector.extract_strided_slice %29 {offsets = [8, 0], sizes = [8, 64], strides = [1, 1]} : vector<64x64xf32> to vector<8x64xf32>
    %32 = arith.maximumf %30, %31 : vector<8x64xf32>
    %33 = vector.extract_strided_slice %29 {offsets = [16, 0], sizes = [8, 64], strides = [1, 1]} : vector<64x64xf32> to vector<8x64xf32>
    %34 = vector.extract_strided_slice %29 {offsets = [24, 0], sizes = [8, 64], strides = [1, 1]} : vector<64x64xf32> to vector<8x64xf32>
    %35 = arith.maximumf %33, %34 : vector<8x64xf32>
    %36 = vector.extract_strided_slice %29 {offsets = [32, 0], sizes = [8, 64], strides = [1, 1]} : vector<64x64xf32> to vector<8x64xf32>
    %37 = vector.extract_strided_slice %29 {offsets = [40, 0], sizes = [8, 64], strides = [1, 1]} : vector<64x64xf32> to vector<8x64xf32>
    %38 = arith.maximumf %36, %37 : vector<8x64xf32>
    %39 = vector.extract_strided_slice %29 {offsets = [48, 0], sizes = [8, 64], strides = [1, 1]} : vector<64x64xf32> to vector<8x64xf32>
    %40 = vector.extract_strided_slice %29 {offsets = [56, 0], sizes = [8, 64], strides = [1, 1]} : vector<64x64xf32> to vector<8x64xf32>
    %41 = arith.maximumf %39, %40 : vector<8x64xf32>
    %42 = tpu.concatenate %32, %35, %38, %41 in 1 : vector<8x64xf32>, vector<8x64xf32>, vector<8x64xf32>, vector<8x64xf32> -> vector<8x256xf32>
    %43 = arith.truncf %42 : vector<8x256xf32> to vector<8x256xbf16>
    %c0_29 = arith.constant 0 : index
    %c0_30 = arith.constant 0 : index
    %44 = vector.load %arg7[%c0_29, %c0_30] : memref<256x32xbf16, #tpu.memory_space<vmem>>, vector<256x32xbf16>
    %cst_31 = arith.constant dense<0.000000e+00> : vector<8x32xf32>
    %45 = tpu.matmul %43, %44, %cst_31 {dimension_numbers = #tpu.dot_dimension_numbers<[1], [0], [0], [1], [0, 0, 1, 1], [], []>} : vector<8x256xbf16>, vector<256x32xbf16>, vector<8x32xf32> -> vector<8x32xf32>
    %c0_32 = arith.constant 0 : index
    %c0_33 = arith.constant 0 : index
    %46 = vector.load %arg8[%c0_32, %c0_33] : memref<1x32xf32, #tpu.memory_space<vmem>>, vector<1x32xf32>
    %47 = vector.broadcast %46 : vector<1x32xf32> to vector<8x32xf32>
    %48 = arith.addf %45, %47 : vector<8x32xf32>
    %cst_34 = arith.constant 0.000000e+00 : f32
    %49 = vector.broadcast %cst_34 : f32 to vector<8x32xf32>
    %50 = arith.maximumf %48, %49 : vector<8x32xf32>
    %51 = arith.truncf %50 : vector<8x32xf32> to vector<8x32xbf16>
    %c0_35 = arith.constant 0 : index
    %c0_36 = arith.constant 0 : index
    %52 = vector.load %arg9[%c0_35, %c0_36] : memref<32x32xbf16, #tpu.memory_space<vmem>>, vector<32x32xbf16>
    %cst_37 = arith.constant dense<0.000000e+00> : vector<8x32xf32>
    %53 = tpu.matmul %51, %52, %cst_37 {dimension_numbers = #tpu.dot_dimension_numbers<[1], [0], [0], [1], [0, 0, 1, 1], [], []>} : vector<8x32xbf16>, vector<32x32xbf16>, vector<8x32xf32> -> vector<8x32xf32>
    %c0_38 = arith.constant 0 : index
    %c0_39 = arith.constant 0 : index
    %54 = vector.load %arg10[%c0_38, %c0_39] : memref<1x32xf32, #tpu.memory_space<vmem>>, vector<1x32xf32>
    %55 = vector.broadcast %54 : vector<1x32xf32> to vector<8x32xf32>
    %56 = arith.addf %53, %55 : vector<8x32xf32>
    %c0_40 = arith.constant 0 : index
    %c0_41 = arith.constant 0 : index
    %57 = vector.load %arg11[%c0_40, %c0_41] : memref<32x32xbf16, #tpu.memory_space<vmem>>, vector<32x32xbf16>
    %cst_42 = arith.constant dense<0.000000e+00> : vector<8x32xf32>
    %58 = tpu.matmul %51, %57, %cst_42 {dimension_numbers = #tpu.dot_dimension_numbers<[1], [0], [0], [1], [0, 0, 1, 1], [], []>} : vector<8x32xbf16>, vector<32x32xbf16>, vector<8x32xf32> -> vector<8x32xf32>
    %c0_43 = arith.constant 0 : index
    %c0_44 = arith.constant 0 : index
    %59 = vector.load %arg12[%c0_43, %c0_44] : memref<1x32xf32, #tpu.memory_space<vmem>>, vector<1x32xf32>
    %60 = vector.broadcast %59 : vector<1x32xf32> to vector<8x32xf32>
    %61 = arith.addf %58, %60 : vector<8x32xf32>
    %c0_45 = arith.constant 0 : index
    %c0_46 = arith.constant 0 : index
    %62 = vector.load %arg13[%c0_45, %c0_46] : memref<32x32xbf16, #tpu.memory_space<vmem>>, vector<32x32xbf16>
    %cst_47 = arith.constant dense<0.000000e+00> : vector<8x32xf32>
    %63 = tpu.matmul %51, %62, %cst_47 {dimension_numbers = #tpu.dot_dimension_numbers<[1], [0], [0], [1], [0, 0, 1, 1], [], []>} : vector<8x32xbf16>, vector<32x32xbf16>, vector<8x32xf32> -> vector<8x32xf32>
    %c0_48 = arith.constant 0 : index
    %c0_49 = arith.constant 0 : index
    %64 = vector.load %arg14[%c0_48, %c0_49] : memref<1x32xf32, #tpu.memory_space<vmem>>, vector<1x32xf32>
    %65 = vector.broadcast %64 : vector<1x32xf32> to vector<8x32xf32>
    %66 = arith.addf %63, %65 : vector<8x32xf32>
    "tpu.trace_start"() <{level = 10 : i32, message = "ih,jh->ij"}> : () -> ()
    %cst_50 = arith.constant dense<0.000000e+00> : vector<8x8xf32>
    %67 = tpu.matmul %56, %61, %cst_50 {dimension_numbers = #tpu.dot_dimension_numbers<[1], [1], [0], [0], [0, 0, 1, 0], [], []>} : vector<8x32xf32>, vector<8x32xf32>, vector<8x8xf32> -> vector<8x8xf32>
    "tpu.trace_stop"() : () -> ()
    %cst_51 = arith.constant 0.176776692 : f32
    %68 = vector.broadcast %cst_51 : f32 to vector<8x8xf32>
    %69 = arith.mulf %67, %68 : vector<8x8xf32>
    %70 = tpu.iota {dimensions = array<i32: 1>} : vector<8x8xi32>
    %c2_i32 = arith.constant 2 : i32
    %71 = vector.broadcast %c2_i32 : i32 to vector<8x8xi32>
    %72 = arith.cmpi slt, %70, %71 : vector<8x8xi32>
    %cst_52 = arith.constant -1.000000e+30 : f32
    %73 = vector.broadcast %cst_52 : f32 to vector<8x8xf32>
    %74 = arith.select %72, %69, %73 : vector<8x8xi1>, vector<8x8xf32>
    %cst_53 = arith.constant dense<0xFF800000> : vector<8xf32>
    %75 = vector.multi_reduction <maximumf>, %74, %cst_53 [1] : vector<8x8xf32> to vector<8xf32>
    %76 = vector.shape_cast %75 : vector<8xf32> to vector<8x1xf32>
    %77 = vector.broadcast %76 : vector<8x1xf32> to vector<8x8xf32>
    %78 = arith.subf %74, %77 : vector<8x8xf32>
    %79 = math.exp %78 : vector<8x8xf32>
    %cst_54 = arith.constant dense<0.000000e+00> : vector<8xf32>
    %80 = vector.multi_reduction <add>, %79, %cst_54 [1] : vector<8x8xf32> to vector<8xf32>
    %81 = vector.shape_cast %80 : vector<8xf32> to vector<8x1xf32>
    %82 = tpu.reciprocal %81 {approx = true} : vector<8x1xf32> -> vector<8x1xf32>
    %83 = vector.broadcast %82 : vector<8x1xf32> to vector<8x8xf32>
    %84 = arith.mulf %79, %83 : vector<8x8xf32>
    %cst_55 = arith.constant dense<0.000000e+00> : vector<8x32xf32>
    %85 = tpu.matmul %84, %66, %cst_55 {dimension_numbers = #tpu.dot_dimension_numbers<[1], [0], [0], [1], [0, 0, 1, 1], [], []>} : vector<8x8xf32>, vector<8x32xf32>, vector<8x32xf32> -> vector<8x32xf32>
    %86 = arith.truncf %85 : vector<8x32xf32> to vector<8x32xbf16>
    %c0_56 = arith.constant 0 : index
    %c0_57 = arith.constant 0 : index
    %87 = vector.load %arg15[%c0_56, %c0_57] : memref<32x4xbf16, #tpu.memory_space<vmem>>, vector<32x4xbf16>
    %cst_58 = arith.constant dense<0.000000e+00> : vector<8x4xf32>
    %88 = tpu.matmul %86, %87, %cst_58 {dimension_numbers = #tpu.dot_dimension_numbers<[1], [0], [0], [1], [0, 0, 1, 1], [], []>} : vector<8x32xbf16>, vector<32x4xbf16>, vector<8x4xf32> -> vector<8x4xf32>
    %c0_59 = arith.constant 0 : index
    %c0_60 = arith.constant 0 : index
    %89 = vector.load %arg16[%c0_59, %c0_60] : memref<1x4xf32, #tpu.memory_space<vmem>>, vector<1x4xf32>
    %90 = vector.broadcast %89 : vector<1x4xf32> to vector<8x4xf32>
    %91 = arith.addf %88, %90 : vector<8x4xf32>
    %cst_61 = arith.constant 0.000000e+00 : f32
    %92 = vector.broadcast %cst_61 : f32 to vector<8x4xf32>
    %93 = arith.subf %92, %91 : vector<8x4xf32>
    %94 = math.exp %93 : vector<8x4xf32>
    %cst_62 = arith.constant 1.000000e+00 : f32
    %95 = vector.broadcast %cst_62 : f32 to vector<8x4xf32>
    %96 = arith.addf %95, %94 : vector<8x4xf32>
    %cst_63 = arith.constant 1.000000e+00 : f32
    %97 = vector.broadcast %cst_63 : f32 to vector<8x4xf32>
    %98 = arith.divf %97, %96 : vector<8x4xf32>
    %c0_64 = arith.constant 0 : index
    %c0_65 = arith.constant 0 : index
    %c0_66 = arith.constant 0 : index
    %99 = vector.load %arg17[%c0_64, %c0_65, %c0_66] : memref<1x8x4xf32, #tpu.memory_space<vmem>>, vector<1x8x4xf32>
    %100 = vector.shape_cast %99 : vector<1x8x4xf32> to vector<8x4xf32>
    %101 = vector.shape_cast %98 : vector<8x4xf32> to vector<1x8x4xf32>
    tpu.vector_store %arg17[%c0_64, %c0_65, %c0_66], %101 {strides = array<i32>} : memref<1x8x4xf32, #tpu.memory_space<vmem>>, vector<1x8x4xf32>,
    return
  }
  func.func @transform_0(%arg0: i32) -> (i32, i32, i32) {
    %c0_i32 = arith.constant 0 : i32
    %c0_i32_0 = arith.constant 0 : i32
    %c0_i32_1 = arith.constant 0 : i32
    return %arg0, %c0_i32, %c0_i32_0 : i32, i32, i32
  }
  func.func @transform_1(%arg0: i32) -> (i32, i32, i32) {
    %c0_i32 = arith.constant 0 : i32
    %c0_i32_0 = arith.constant 0 : i32
    %c0_i32_1 = arith.constant 0 : i32
    return %arg0, %c0_i32, %c0_i32_0 : i32, i32, i32
  }
  func.func @transform_2(%arg0: i32) -> (i32, i32) {
    %c0_i32 = arith.constant 0 : i32
    %c0_i32_0 = arith.constant 0 : i32
    %c0_i32_1 = arith.constant 0 : i32
    return %c0_i32, %c0_i32_0 : i32, i32
  }
  func.func @transform_3(%arg0: i32) -> (i32, i32) {
    %c0_i32 = arith.constant 0 : i32
    %c0_i32_0 = arith.constant 0 : i32
    %c0_i32_1 = arith.constant 0 : i32
    return %c0_i32, %c0_i32_0 : i32, i32
  }
  func.func @transform_4(%arg0: i32) -> (i32, i32) {
    %c0_i32 = arith.constant 0 : i32
    %c0_i32_0 = arith.constant 0 : i32
    %c0_i32_1 = arith.constant 0 : i32
    return %c0_i32, %c0_i32_0 : i32, i32
  }
  func.func @transform_5(%arg0: i32) -> (i32, i32) {
    %c0_i32 = arith.constant 0 : i32
    %c0_i32_0 = arith.constant 0 : i32
    %c0_i32_1 = arith.constant 0 : i32
    return %c0_i32, %c0_i32_0 : i32, i32
  }
  func.func @transform_6(%arg0: i32) -> (i32, i32) {
    %c0_i32 = arith.constant 0 : i32
    %c0_i32_0 = arith.constant 0 : i32
    %c0_i32_1 = arith.constant 0 : i32
    return %c0_i32, %c0_i32_0 : i32, i32
  }
  func.func @transform_7(%arg0: i32) -> (i32, i32) {
    %c0_i32 = arith.constant 0 : i32
    %c0_i32_0 = arith.constant 0 : i32
    %c0_i32_1 = arith.constant 0 : i32
    return %c0_i32, %c0_i32_0 : i32, i32
  }
  func.func @transform_8(%arg0: i32) -> (i32, i32) {
    %c0_i32 = arith.constant 0 : i32
    %c0_i32_0 = arith.constant 0 : i32
    %c0_i32_1 = arith.constant 0 : i32
    return %c0_i32, %c0_i32_0 : i32, i32
  }
  func.func @transform_9(%arg0: i32) -> (i32, i32) {
    %c0_i32 = arith.constant 0 : i32
    %c0_i32_0 = arith.constant 0 : i32
    %c0_i32_1 = arith.constant 0 : i32
    return %c0_i32, %c0_i32_0 : i32, i32
  }
  func.func @transform_10(%arg0: i32) -> (i32, i32) {
    %c0_i32 = arith.constant 0 : i32
    %c0_i32_0 = arith.constant 0 : i32
    %c0_i32_1 = arith.constant 0 : i32
    return %c0_i32, %c0_i32_0 : i32, i32
  }
  func.func @transform_11(%arg0: i32) -> (i32, i32) {
    %c0_i32 = arith.constant 0 : i32
    %c0_i32_0 = arith.constant 0 : i32
    %c0_i32_1 = arith.constant 0 : i32
    return %c0_i32, %c0_i32_0 : i32, i32
  }
  func.func @transform_12(%arg0: i32) -> (i32, i32) {
    %c0_i32 = arith.constant 0 : i32
    %c0_i32_0 = arith.constant 0 : i32
    %c0_i32_1 = arith.constant 0 : i32
    return %c0_i32, %c0_i32_0 : i32, i32
  }
  func.func @transform_13(%arg0: i32) -> (i32, i32) {
    %c0_i32 = arith.constant 0 : i32
    %c0_i32_0 = arith.constant 0 : i32
    %c0_i32_1 = arith.constant 0 : i32
    return %c0_i32, %c0_i32_0 : i32, i32
  }
  func.func @transform_14(%arg0: i32) -> (i32, i32) {
    %c0_i32 = arith.constant 0 : i32
    %c0_i32_0 = arith.constant 0 : i32
    %c0_i32_1 = arith.constant 0 : i32
    return %c0_i32, %c0_i32_0 : i32, i32
  }
  func.func @transform_15(%arg0: i32) -> (i32, i32) {
    %c0_i32 = arith.constant 0 : i32
    %c0_i32_0 = arith.constant 0 : i32
    %c0_i32_1 = arith.constant 0 : i32
    return %c0_i32, %c0_i32_0 : i32, i32
  }
  func.func @transform_16(%arg0: i32) -> (i32, i32, i32) {
    %c0_i32 = arith.constant 0 : i32
    %c0_i32_0 = arith.constant 0 : i32
    %c0_i32_1 = arith.constant 0 : i32
    return %arg0, %c0_i32, %c0_i32_0 : i32, i32, i32
  }
}

</mosaic_0001>

<llo_original>
// kernel: cnn_attention_forward.1
$region0: #{cnn_attention_forward.1}
  #allocation0 [shape = 'u32[]', space=smem, size = 0x4, offset = 0x4, fixed_abs, tag = 'smem constant byte address 0x4 - core index']
  #allocation1 [shape = 'u32[72,128]{1,0:T(1,128)}', space=vmem, size = 0x9000, scoped, tag = 'internal scratch']
  #allocation2 [shape = 'f32[80,32]{1,0:T(8,128)}', space=vmem, size = 0xa000, scoped, tag = 'scratch operand']
  %s0 = inlined_call_operand.vmem [shape: bf16[4,64,3], index: 0, kind: input, shape index: {}]
  %s1 = inlined_call_operand.vmem [shape: bf16[4,64,3], index: 1, kind: input, shape index: {}]
  %s2 = inlined_call_operand.vmem [shape: bf16[3,32], index: 2, kind: input, shape index: {}]
  %s3 = inlined_call_operand.vmem [shape: f32[1,32], index: 3, kind: input, shape index: {}]
  %s4 = inlined_call_operand.vmem [shape: bf16[96,64], index: 4, kind: input, shape index: {}]
  %s5 = inlined_call_operand.vmem [shape: f32[1,64], index: 5, kind: input, shape index: {}]
  %s6 = inlined_call_operand.vmem [shape: bf16[256,32], index: 6, kind: input, shape index: {}]
  %s7 = inlined_call_operand.vmem [shape: f32[1,32], index: 7, kind: input, shape index: {}]
  %s8 = inlined_call_operand.vmem [shape: bf16[32,32], index: 8, kind: input, shape index: {}]
  %s9 = inlined_call_operand.vmem [shape: f32[1,32], index: 9, kind: input, shape index: {}]
  %s10 = inlined_call_operand.vmem [shape: bf16[32,32], index: 10, kind: input, shape index: {}]
  %s11 = inlined_call_operand.vmem [shape: f32[1,32], index: 11, kind: input, shape index: {}]
  %s12 = inlined_call_operand.vmem [shape: bf16[32,32], index: 12, kind: input, shape index: {}]
  %s13 = inlined_call_operand.vmem [shape: f32[1,32], index: 13, kind: input, shape index: {}]
  %s14 = inlined_call_operand.vmem [shape: bf16[32,4], index: 14, kind: input, shape index: {}]
  %s15 = inlined_call_operand.vmem [shape: f32[1,4], index: 15, kind: input, shape index: {}]
  %s16 = inlined_call_operand.vmem [shape: f32[4,8,4], index: 16, kind: output, shape index: {}]
  %s17 = sld [smem:[#allocation0]]
  $region97: #{cnn_attention_forward.1} parent=0
    _
  %s19 = ssub.s32 1, %s17
  %s20 = scalar_select 0, %s19, %s17
  loop: start=0, step=1, limit=6
  $region2: #{cnn_attention_forward.1} parent=0 // loop_pre_header
    _
  $region3: #{cnn_attention_forward.1} parent=0 // loop_header
    %s22 = sphi 0, %s26
    %p23 = scmp.ge.s32.totalorder %s22, 6
    %s32 = sphi 0, %s34
    %s35 = sphi 0, %s32
    %s36 = sphi 0, %s35
    %s52 = sphi 0, %s36
    %s58 = sphi 0, %s60
    %s61 = sphi 0, %s58
    %s62 = sphi 0, %s61
    %s78 = sphi 0, %s62
    %s82 = sphi 0, %s82
    %s84 = sphi 0, %s82
    %s85 = sphi 0, %s84
    %s99 = sphi 0, %s85
    %s103 = sphi 0, %s103
    %s105 = sphi 0, %s103
    %s106 = sphi 0, %s105
    %s120 = sphi 0, %s106
    %s124 = sphi 0, %s124
    %s126 = sphi 0, %s124
    %s127 = sphi 0, %s126
    %s141 = sphi 0, %s127
    %s145 = sphi 0, %s145
    %s147 = sphi 0, %s145
    %s148 = sphi 0, %s147
    %s162 = sphi 0, %s148
    %s166 = sphi 0, %s166
    %s168 = sphi 0, %s166
    %s169 = sphi 0, %s168
    %s183 = sphi 0, %s169
    %s187 = sphi 0, %s187
    %s189 = sphi 0, %s187
    %s190 = sphi 0, %s189
    %s204 = sphi 0, %s190
    %s208 = sphi 0, %s208
    %s210 = sphi 0, %s208
    %s211 = sphi 0, %s210
    %s225 = sphi 0, %s211
    %s229 = sphi 0, %s229
    %s231 = sphi 0, %s229
    %s232 = sphi 0, %s231
    %s246 = sphi 0, %s232
    %s250 = sphi 0, %s250
    %s252 = sphi 0, %s250
    %s253 = sphi 0, %s252
    %s267 = sphi 0, %s253
    %s271 = sphi 0, %s271
    %s273 = sphi 0, %s271
    %s274 = sphi 0, %s273
    %s288 = sphi 0, %s274
    %s292 = sphi 0, %s292
    %s294 = sphi 0, %s292
    %s295 = sphi 0, %s294
    %s309 = sphi 0, %s295
    %s313 = sphi 0, %s313
    %s315 = sphi 0, %s313
    %s316 = sphi 0, %s315
    %s330 = sphi 0, %s316
    %s334 = sphi 0, %s334
    %s336 = sphi 0, %s334
    %s337 = sphi 0, %s336
    %s351 = sphi 0, %s337
    %s355 = sphi 0, %s355
    %s357 = sphi 0, %s355
    %s358 = sphi 0, %s357
    %s372 = sphi 0, %s358
    %s378 = sphi 0, %s380
    %s381 = sphi 0, %s378
    %s382 = sphi 0, %s381
    %s398 = sphi 0, %s382
  $region4: #{cnn_attention_forward.1} parent=0 // loop_header_branch
    %25 = sbr.rel (%p23) target = $region8
  $region5: #{cnn_attention_forward.1} parent=0 // loop_body
    %s27 = ssub.s32 %s22, 1
    %s28 = ssub.s32 %s22, 2
    %s29 = sadd.s32 %s22, 1
    %s30 = ssub.s32 %s22, %s29
    %p31 = scmp.eq.s32.totalorder %s30, 0
    %s33 = sadd.s32 %s32, 1
    %s34 = scalar_select %p31, %s32, %s33
    %p37 = pneg %p31
    %p38 = scmp.eq.s32.totalorder %s22, 3
    %p39 = por %p37, %p38
    %p40 = scmp.ne.s32.totalorder %s32, %s35
    %p41 = scmp.eq.s32.totalorder %s22, 0
    %p42 = por %p40, %p41
    %p43 = scmp.ne.s32.totalorder %s32, %s35
    %p44 = scmp.eq.s32.totalorder %s27, 3
    %p45 = por %p43, %p44
    %p46 = scmp.ne.s32.totalorder %s35, %s36
    %p47 = scmp.eq.s32.totalorder %s27, 0
    %p48 = por %p46, %p47
    %p49 = scmp.ne.s32.totalorder %s35, %s36
    %p50 = scmp.eq.s32.totalorder %s28, 3
    %p51 = por %p49, %p50
    %p53 = scmp.ne.s32.totalorder %s36, %s52
    %p54 = scmp.eq.s32.totalorder %s28, 0
    %p55 = por %p53, %p54
    %s56 = ssub.s32 %s22, %s29
    %p57 = scmp.eq.s32.totalorder %s56, 0
    %s59 = sadd.s32 %s58, 1
    %s60 = scalar_select %p57, %s58, %s59
    %p63 = pneg %p57
    %p64 = scmp.eq.s32.totalorder %s22, 3
    %p65 = por %p63, %p64
    %p66 = scmp.ne.s32.totalorder %s58, %s61
    %p67 = scmp.eq.s32.totalorder %s22, 0
    %p68 = por %p66, %p67
    %p69 = scmp.ne.s32.totalorder %s58, %s61
    %p70 = scmp.eq.s32.totalorder %s27, 3
    %p71 = por %p69, %p70
    %p72 = scmp.ne.s32.totalorder %s61, %s62
    %p73 = scmp.eq.s32.totalorder %s27, 0
    %p74 = por %p72, %p73
    %p75 = scmp.ne.s32.totalorder %s61, %s62
    %p76 = scmp.eq.s32.totalorder %s28, 3
    %p77 = por %p75, %p76
    %p79 = scmp.ne.s32.totalorder %s62, %s78
    %p80 = scmp.eq.s32.totalorder %s28, 0
    %p81 = por %p79, %p80
    %s83 = sadd.s32 %s82, 1
    %p86 = scmp.eq.s32.totalorder %s22, 3
    %p87 = scmp.ne.s32.totalorder %s82, %s84
    %p88 = scmp.eq.s32.totalorder %s22, 0
    %p89 = por %p87, %p88
    %p90 = scmp.ne.s32.totalorder %s82, %s84
    %p91 = scmp.eq.s32.totalorder %s27, 3
    %p92 = por %p90, %p91
    %p93 = scmp.ne.s32.totalorder %s84, %s85
    %p94 = scmp.eq.s32.totalorder %s27, 0
    %p95 = por %p93, %p94
    %p96 = scmp.ne.s32.totalorder %s84, %s85
    %p97 = scmp.eq.s32.totalorder %s28, 3
    %p98 = por %p96, %p97
    %p100 = scmp.ne.s32.totalorder %s85, %s99
    %p101 = scmp.eq.s32.totalorder %s28, 0
    %p102 = por %p100, %p101
    %s104 = sadd.s32 %s103, 1
    %p107 = scmp.eq.s32.totalorder %s22, 3
    %p108 = scmp.ne.s32.totalorder %s103, %s105
    %p109 = scmp.eq.s32.totalorder %s22, 0
    %p110 = por %p108, %p109
    %p111 = scmp.ne.s32.totalorder %s103, %s105
    %p112 = scmp.eq.s32.totalorder %s27, 3
    %p113 = por %p111, %p112
    %p114 = scmp.ne.s32.totalorder %s105, %s106
    %p115 = scmp.eq.s32.totalorder %s27, 0
    %p116 = por %p114, %p115
    %p117 = scmp.ne.s32.totalorder %s105, %s106
    %p118 = scmp.eq.s32.totalorder %s28, 3
    %p119 = por %p117, %p118
    %p121 = scmp.ne.s32.totalorder %s106, %s120
    %p122 = scmp.eq.s32.totalorder %s28, 0
    %p123 = por %p121, %p122
    %s125 = sadd.s32 %s124, 1
    %p128 = scmp.eq.s32.totalorder %s22, 3
    %p129 = scmp.ne.s32.totalorder %s124, %s126
    %p130 = scmp.eq.s32.totalorder %s22, 0
    %p131 = por %p129, %p130
    %p132 = scmp.ne.s32.totalorder %s124, %s126
    %p133 = scmp.eq.s32.totalorder %s27, 3
    %p134 = por %p132, %p133
    %p135 = scmp.ne.s32.totalorder %s126, %s127
    %p136 = scmp.eq.s32.totalorder %s27, 0
    %p137 = por %p135, %p136
    %p138 = scmp.ne.s32.totalorder %s126, %s127
    %p139 = scmp.eq.s32.totalorder %s28, 3
    %p140 = por %p138, %p139
    %p142 = scmp.ne.s32.totalorder %s127, %s141
    %p143 = scmp.eq.s32.totalorder %s28, 0
    %p144 = por %p142, %p143
    %s146 = sadd.s32 %s145, 1
    %p149 = scmp.eq.s32.totalorder %s22, 3
    %p150 = scmp.ne.s32.totalorder %s145, %s147
    %p151 = scmp.eq.s32.totalorder %s22, 0
    %p152 = por %p150, %p151
    %p153 = scmp.ne.s32.totalorder %s145, %s147
    %p154 = scmp.eq.s32.totalorder %s27, 3
    %p155 = por %p153, %p154
    %p156 = scmp.ne.s32.totalorder %s147, %s148
    %p157 = scmp.eq.s32.totalorder %s27, 0
    %p158 = por %p156, %p157
    %p159 = scmp.ne.s32.totalorder %s147, %s148
    %p160 = scmp.eq.s32.totalorder %s28, 3
    %p161 = por %p159, %p160
    %p163 = scmp.ne.s32.totalorder %s148, %s162
    %p164 = scmp.eq.s32.totalorder %s28, 0
    %p165 = por %p163, %p164
    %s167 = sadd.s32 %s166, 1
    %p170 = scmp.eq.s32.totalorder %s22, 3
    %p171 = scmp.ne.s32.totalorder %s166, %s168
    %p172 = scmp.eq.s32.totalorder %s22, 0
    %p173 = por %p171, %p172
    %p174 = scmp.ne.s32.totalorder %s166, %s168
    %p175 = scmp.eq.s32.totalorder %s27, 3
    %p176 = por %p174, %p175
    %p177 = scmp.ne.s32.totalorder %s168, %s169
    %p178 = scmp.eq.s32.totalorder %s27, 0
    %p179 = por %p177, %p178
    %p180 = scmp.ne.s32.totalorder %s168, %s169
    %p181 = scmp.eq.s32.totalorder %s28, 3
    %p182 = por %p180, %p181
    %p184 = scmp.ne.s32.totalorder %s169, %s183
    %p185 = scmp.eq.s32.totalorder %s28, 0
    %p186 = por %p184, %p185
    %s188 = sadd.s32 %s187, 1
    %p191 = scmp.eq.s32.totalorder %s22, 3
    %p192 = scmp.ne.s32.totalorder %s187, %s189
    %p193 = scmp.eq.s32.totalorder %s22, 0
    %p194 = por %p192, %p193
    %p195 = scmp.ne.s32.totalorder %s187, %s189
    %p196 = scmp.eq.s32.totalorder %s27, 3
    %p197 = por %p195, %p196
    %p198 = scmp.ne.s32.totalorder %s189, %s190
    %p199 = scmp.eq.s32.totalorder %s27, 0
    %p200 = por %p198, %p199
    %p201 = scmp.ne.s32.totalorder %s189, %s190
    %p202 = scmp.eq.s32.totalorder %s28, 3
    %p203 = por %p201, %p202
    %p205 = scmp.ne.s32.totalorder %s190, %s204
    %p206 = scmp.eq.s32.totalorder %s28, 0
    %p207 = por %p205, %p206
    %s209 = sadd.s32 %s208, 1
    %p212 = scmp.eq.s32.totalorder %s22, 3
    %p213 = scmp.ne.s32.totalorder %s208, %s210
    %p214 = scmp.eq.s32.totalorder %s22, 0
    %p215 = por %p213, %p214
    %p216 = scmp.ne.s32.totalorder %s208, %s210
    %p217 = scmp.eq.s32.totalorder %s27, 3
    %p218 = por %p216, %p217
    %p219 = scmp.ne.s32.totalorder %s210, %s211
    %p220 = scmp.eq.s32.totalorder %s27, 0
    %p221 = por %p219, %p220
    %p222 = scmp.ne.s32.totalorder %s210, %s211
    %p223 = scmp.eq.s32.totalorder %s28, 3
    %p224 = por %p222, %p223
    %p226 = scmp.ne.s32.totalorder %s211, %s225
    %p227 = scmp.eq.s32.totalorder %s28, 0
    %p228 = por %p226, %p227
    %s230 = sadd.s32 %s229, 1
    %p233 = scmp.eq.s32.totalorder %s22, 3
    %p234 = scmp.ne.s32.totalorder %s229, %s231
    %p235 = scmp.eq.s32.totalorder %s22, 0
    %p236 = por %p234, %p235
    %p237 = scmp.ne.s32.totalorder %s229, %s231
    %p238 = scmp.eq.s32.totalorder %s27, 3
    %p239 = por %p237, %p238
    %p240 = scmp.ne.s32.totalorder %s231, %s232
    %p241 = scmp.eq.s32.totalorder %s27, 0
    %p242 = por %p240, %p241
    %p243 = scmp.ne.s32.totalorder %s231, %s232
    %p244 = scmp.eq.s32.totalorder %s28, 3
    %p245 = por %p243, %p244
    %p247 = scmp.ne.s32.totalorder %s232, %s246
    %p248 = scmp.eq.s32.totalorder %s28, 0
    %p249 = por %p247, %p248
    %s251 = sadd.s32 %s250, 1
    %p254 = scmp.eq.s32.totalorder %s22, 3
    %p255 = scmp.ne.s32.totalorder %s250, %s252
    %p256 = scmp.eq.s32.totalorder %s22, 0
    %p257 = por %p255, %p256
    %p258 = scmp.ne.s32.totalorder %s250, %s252
    %p259 = scmp.eq.s32.totalorder %s27, 3
    %p260 = por %p258, %p259
    %p261 = scmp.ne.s32.totalorder %s252, %s253
    %p262 = scmp.eq.s32.totalorder %s27, 0
    %p263 = por %p261, %p262
    %p264 = scmp.ne.s32.totalorder %s252, %s253
    %p265 = scmp.eq.s32.totalorder %s28, 3
    %p266 = por %p264, %p265
    %p268 = scmp.ne.s32.totalorder %s253, %s267
    %p269 = scmp.eq.s32.totalorder %s28, 0
    %p270 = por %p268, %p269
    %s272 = sadd.s32 %s271, 1
    %p275 = scmp.eq.s32.totalorder %s22, 3
    %p276 = scmp.ne.s32.totalorder %s271, %s273
    %p277 = scmp.eq.s32.totalorder %s22, 0
    %p278 = por %p276, %p277
    %p279 = scmp.ne.s32.totalorder %s271, %s273
    %p280 = scmp.eq.s32.totalorder %s27, 3
    %p281 = por %p279, %p280
    %p282 = scmp.ne.s32.totalorder %s273, %s274
    %p283 = scmp.eq.s32.totalorder %s27, 0
    %p284 = por %p282, %p283
    %p285 = scmp.ne.s32.totalorder %s273, %s274
    %p286 = scmp.eq.s32.totalorder %s28, 3
    %p287 = por %p285, %p286
    %p289 = scmp.ne.s32.totalorder %s274, %s288
    %p290 = scmp.eq.s32.totalorder %s28, 0
    %p291 = por %p289, %p290
    %s293 = sadd.s32 %s292, 1
    %p296 = scmp.eq.s32.totalorder %s22, 3
    %p297 = scmp.ne.s32.totalorder %s292, %s294
    %p298 = scmp.eq.s32.totalorder %s22, 0
    %p299 = por %p297, %p298
    %p300 = scmp.ne.s32.totalorder %s292, %s294
    %p301 = scmp.eq.s32.totalorder %s27, 3
    %p302 = por %p300, %p301
    %p303 = scmp.ne.s32.totalorder %s294, %s295
    %p304 = scmp.eq.s32.totalorder %s27, 0
    %p305 = por %p303, %p304
    %p306 = scmp.ne.s32.totalorder %s294, %s295
    %p307 = scmp.eq.s32.totalorder %s28, 3
    %p308 = por %p306, %p307
    %p310 = scmp.ne.s32.totalorder %s295, %s309
    %p311 = scmp.eq.s32.totalorder %s28, 0
    %p312 = por %p310, %p311
    %s314 = sadd.s32 %s313, 1
    %p317 = scmp.eq.s32.totalorder %s22, 3
    %p318 = scmp.ne.s32.totalorder %s313, %s315
    %p319 = scmp.eq.s32.totalorder %s22, 0
    %p320 = por %p318, %p319
    %p321 = scmp.ne.s32.totalorder %s313, %s315
    %p322 = scmp.eq.s32.totalorder %s27, 3
    %p323 = por %p321, %p322
    %p324 = scmp.ne.s32.totalorder %s315, %s316
    %p325 = scmp.eq.s32.totalorder %s27, 0
    %p326 = por %p324, %p325
    %p327 = scmp.ne.s32.totalorder %s315, %s316
    %p328 = scmp.eq.s32.totalorder %s28, 3
    %p329 = por %p327, %p328
    %p331 = scmp.ne.s32.totalorder %s316, %s330
    %p332 = scmp.eq.s32.totalorder %s28, 0
    %p333 = por %p331, %p332
    %s335 = sadd.s32 %s334, 1
    %p338 = scmp.eq.s32.totalorder %s22, 3
    %p339 = scmp.ne.s32.totalorder %s334, %s336
    %p340 = scmp.eq.s32.totalorder %s22, 0
    %p341 = por %p339, %p340
    %p342 = scmp.ne.s32.totalorder %s334, %s336
    %p343 = scmp.eq.s32.totalorder %s27, 3
    %p344 = por %p342, %p343
    %p345 = scmp.ne.s32.totalorder %s336, %s337
    %p346 = scmp.eq.s32.totalorder %s27, 0
    %p347 = por %p345, %p346
    %p348 = scmp.ne.s32.totalorder %s336, %s337
    %p349 = scmp.eq.s32.totalorder %s28, 3
    %p350 = por %p348, %p349
    %p352 = scmp.ne.s32.totalorder %s337, %s351
    %p353 = scmp.eq.s32.totalorder %s28, 0
    %p354 = por %p352, %p353
    %s356 = sadd.s32 %s355, 1
    %p359 = scmp.eq.s32.totalorder %s22, 3
    %p360 = scmp.ne.s32.totalorder %s355, %s357
    %p361 = scmp.eq.s32.totalorder %s22, 0
    %p362 = por %p360, %p361
    %p363 = scmp.ne.s32.totalorder %s355, %s357
    %p364 = scmp.eq.s32.totalorder %s27, 3
    %p365 = por %p363, %p364
    %p366 = scmp.ne.s32.totalorder %s357, %s358
    %p367 = scmp.eq.s32.totalorder %s27, 0
    %p368 = por %p366, %p367
    %p369 = scmp.ne.s32.totalorder %s357, %s358
    %p370 = scmp.eq.s32.totalorder %s28, 3
    %p371 = por %p369, %p370
    %p373 = scmp.ne.s32.totalorder %s358, %s372
    %p374 = scmp.eq.s32.totalorder %s28, 0
    %p375 = por %p373, %p374
    %s376 = ssub.s32 %s22, %s29
    %p377 = scmp.eq.s32.totalorder %s376, 0
    %s379 = sadd.s32 %s378, 1
    %s380 = scalar_select %p377, %s378, %s379
    %p383 = pneg %p377
    %p384 = scmp.eq.s32.totalorder %s22, 3
    %p385 = por %p383, %p384
    %p386 = scmp.ne.s32.totalorder %s378, %s381
    %p387 = scmp.eq.s32.totalorder %s22, 0
    %p388 = por %p386, %p387
    %p389 = scmp.ne.s32.totalorder %s378, %s381
    %p390 = scmp.eq.s32.totalorder %s27, 3
    %p391 = por %p389, %p390
    %p392 = scmp.ne.s32.totalorder %s381, %s382
    %p393 = scmp.eq.s32.totalorder %s27, 0
    %p394 = por %p392, %p393
    %p395 = scmp.ne.s32.totalorder %s381, %s382
    %p396 = scmp.eq.s32.totalorder %s28, 3
    %p397 = por %p395, %p396
    %p399 = scmp.ne.s32.totalorder %s382, %s398
    %p400 = scmp.eq.s32.totalorder %s28, 0
    %p401 = por %p399, %p400
    %p402 = scmp.le.s32.totalorder 1, %s22
    %p403 = scmp.lt.s32.totalorder %s22, 5
    %p404 = pnand %p402, %p403
    %p405 = pneg %p404
    // Predicated region
    $region9: #{cnn_attention_forward.1} parent=5 // pred_check
      _
    $region10: #{cnn_attention_forward.1} parent=5 // pred_check_branch
      %407 = sbr.rel (%p404) target = $region12
    $region11: #{cnn_attention_forward.1} parent=5 // pred_region
      %s408 = ssub.s32 %s22, 1
      // Predicated region
      $region13: #{cnn_attention_forward.1} parent=11 // pred_check
        %p409 = pneg %p95
      $region14: #{cnn_attention_forward.1} parent=11 // pred_check_branch
        %411 = sbr.rel (%p409) target = $region16
      $region15: #{cnn_attention_forward.1} parent=11 // pred_region
        _
      $region16: #{cnn_attention_forward.1} parent=11 // pred_fallthru
        _
      // Predicated region
      $region17: #{cnn_attention_forward.1} parent=11 // pred_check
        %p412 = pneg %p116
      $region18: #{cnn_attention_forward.1} parent=11 // pred_check_branch
        %414 = sbr.rel (%p412) target = $region20
      $region19: #{cnn_attention_forward.1} parent=11 // pred_region
        _
      $region20: #{cnn_attention_forward.1} parent=11 // pred_fallthru
        _
      // Predicated region
      $region21: #{cnn_attention_forward.1} parent=11 // pred_check
        %p415 = pneg %p137
      $region22: #{cnn_attention_forward.1} parent=11 // pred_check_branch
        %417 = sbr.rel (%p415) target = $region24
      $region23: #{cnn_attention_forward.1} parent=11 // pred_region
        _
      $region24: #{cnn_attention_forward.1} parent=11 // pred_fallthru
        _
      // Predicated region
      $region25: #{cnn_attention_forward.1} parent=11 // pred_check
        %p418 = pneg %p158
      $region26: #{cnn_attention_forward.1} parent=11 // pred_check_branch
        %420 = sbr.rel (%p418) target = $region28
      $region27: #{cnn_attention_forward.1} parent=11 // pred_region
        _
      $region28: #{cnn_attention_forward.1} parent=11 // pred_fallthru
        _
      // Predicated region
      $region29: #{cnn_attention_forward.1} parent=11 // pred_check
        %p421 = pneg %p179
      $region30: #{cnn_attention_forward.1} parent=11 // pred_check_branch
        %423 = sbr.rel (%p421) target = $region32
      $region31: #{cnn_attention_forward.1} parent=11 // pred_region
        _
      $region32: #{cnn_attention_forward.1} parent=11 // pred_fallthru
        _
      // Predicated region
      $region33: #{cnn_attention_forward.1} parent=11 // pred_check
        %p424 = pneg %p200
      $region34: #{cnn_attention_forward.1} parent=11 // pred_check_branch
        %426 = sbr.rel (%p424) target = $region36
      $region35: #{cnn_attention_forward.1} parent=11 // pred_region
        _
      $region36: #{cnn_attention_forward.1} parent=11 // pred_fallthru
        _
      // Predicated region
      $region37: #{cnn_attention_forward.1} parent=11 // pred_check
        %p427 = pneg %p221
      $region38: #{cnn_attention_forward.1} parent=11 // pred_check_branch
        %429 = sbr.rel (%p427) target = $region40
      $region39: #{cnn_attention_forward.1} parent=11 // pred_region
        _
      $region40: #{cnn_attention_forward.1} parent=11 // pred_fallthru
        _
      // Predicated region
      $region41: #{cnn_attention_forward.1} parent=11 // pred_check
        %p430 = pneg %p242
      $region42: #{cnn_attention_forward.1} parent=11 // pred_check_branch
        %432 = sbr.rel (%p430) target = $region44
      $region43: #{cnn_attention_forward.1} parent=11 // pred_region
        _
      $region44: #{cnn_attention_forward.1} parent=11 // pred_fallthru
        _
      // Predicated region
      $region45: #{cnn_attention_forward.1} parent=11 // pred_check
        %p433 = pneg %p263
      $region46: #{cnn_attention_forward.1} parent=11 // pred_check_branch
        %435 = sbr.rel (%p433) target = $region48
      $region47: #{cnn_attention_forward.1} parent=11 // pred_region
        _
      $region48: #{cnn_attention_forward.1} parent=11 // pred_fallthru
        _
      // Predicated region
      $region49: #{cnn_attention_forward.1} parent=11 // pred_check
        %p436 = pneg %p284
      $region50: #{cnn_attention_forward.1} parent=11 // pred_check_branch
        %438 = sbr.rel (%p436) target = $region52
      $region51: #{cnn_attention_forward.1} parent=11 // pred_region
        _
      $region52: #{cnn_attention_forward.1} parent=11 // pred_fallthru
        _
      // Predicated region
      $region53: #{cnn_attention_forward.1} parent=11 // pred_check
        %p439 = pneg %p305
      $region54: #{cnn_attention_forward.1} parent=11 // pred_check_branch
        %441 = sbr.rel (%p439) target = $region56
      $region55: #{cnn_attention_forward.1} parent=11 // pred_region
        _
      $region56: #{cnn_attention_forward.1} parent=11 // pred_fallthru
        _
      // Predicated region
      $region57: #{cnn_attention_forward.1} parent=11 // pred_check
        %p442 = pneg %p326
      $region58: #{cnn_attention_forward.1} parent=11 // pred_check_branch
        %444 = sbr.rel (%p442) target = $region60
      $region59: #{cnn_attention_forward.1} parent=11 // pred_region
        _
      $region60: #{cnn_attention_forward.1} parent=11 // pred_fallthru
        _
      // Predicated region
      $region61: #{cnn_attention_forward.1} parent=11 // pred_check
        %p445 = pneg %p347
      $region62: #{cnn_attention_forward.1} parent=11 // pred_check_branch
        %447 = sbr.rel (%p445) target = $region64
      $region63: #{cnn_attention_forward.1} parent=11 // pred_region
        _
      $region64: #{cnn_attention_forward.1} parent=11 // pred_fallthru
        _
      // Predicated region
      $region65: #{cnn_attention_forward.1} parent=11 // pred_check
        %p448 = pneg %p368
      $region66: #{cnn_attention_forward.1} parent=11 // pred_check_branch
        %450 = sbr.rel (%p448) target = $region68
      $region67: #{cnn_attention_forward.1} parent=11 // pred_region
        _
      $region68: #{cnn_attention_forward.1} parent=11 // pred_fallthru
        _
    $region12: #{cnn_attention_forward.1} parent=5 // pred_fallthru
      _
    %p451 = scmp.lt.s32.totalorder %s22, 4
    // Predicated region
    $region69: #{cnn_attention_forward.1} parent=5 // pred_check
      %p452 = pneg %p451
    $region70: #{cnn_attention_forward.1} parent=5 // pred_check_branch
      %454 = sbr.rel (%p452) target = $region72
    $region71: #{cnn_attention_forward.1} parent=5 // pred_region
      // Predicated region
      $region73: #{cnn_attention_forward.1} parent=71 // pred_check
        %p455 = pneg %p42
      $region74: #{cnn_attention_forward.1} parent=71 // pred_check_branch
        %457 = sbr.rel (%p455) target = $region76
      $region75: #{cnn_attention_forward.1} parent=71 // pred_region
        %p458 = scmp.lt.s32.totalorder %s22, 3
        %s459 = scalar_select %p458, %s22, 3
        %s460 = smul.addr %s459, 8
        %s461 = smul.addr %s460, 4
        %s462 = scalar_lea.vmem %s0, %s461
      $region76: #{cnn_attention_forward.1} parent=71 // pred_fallthru
        _
      // Predicated region
      $region77: #{cnn_attention_forward.1} parent=71 // pred_check
        %p463 = pneg %p68
      $region78: #{cnn_attention_forward.1} parent=71 // pred_check_branch
        %465 = sbr.rel (%p463) target = $region80
      $region79: #{cnn_attention_forward.1} parent=71 // pred_region
        %p466 = scmp.lt.s32.totalorder %s22, 3
        %s467 = scalar_select %p466, %s22, 3
        %s468 = smul.addr %s467, 8
        %s469 = smul.addr %s468, 4
        %s470 = scalar_lea.vmem %s1, %s469
      $region80: #{cnn_attention_forward.1} parent=71 // pred_fallthru
        _
    $region72: #{cnn_attention_forward.1} parent=5 // pred_fallthru
      _
    %p471 = scmp.le.s32.totalorder 1, %s22
    %p472 = scmp.lt.s32.totalorder %s22, 5
    %p473 = pnand %p471, %p472
    %p474 = pneg %p473
    // Predicated region
    $region81: #{cnn_attention_forward.1} parent=5 // pred_check
      _
    $region82: #{cnn_attention_forward.1} parent=5 // pred_check_branch
      %476 = sbr.rel (%p473) target = $region84
    $region83: #{cnn_attention_forward.1} parent=5 // pred_region
      %s477 = ssub.s32 %s22, 1
      %p478 = scmp.lt.s32.totalorder %s27, 3
      %s479 = scalar_select %p478, %s27, 3
      %s480 = smul.addr %s479, 8
      %s481 = smul.addr %s480, 4
      %s482 = scalar_lea.vmem %s0, %s481
      %p483 = pneg %p48
      %p484 = pneg %p45
      %p485 = scmp.lt.s32.totalorder %s27, 3
      %s486 = scalar_select %p485, %s27, 3
      %s487 = smul.addr %s486, 8
      %s488 = smul.addr %s487, 4
      %s489 = scalar_lea.vmem %s1, %s488
      %p490 = pneg %p74
      %p491 = pneg %p71
      %p492 = pneg %p95
      %p493 = pneg %p92
      %p494 = pneg %p116
      %p495 = pneg %p113
      %p496 = pneg %p137
      %p497 = pneg %p134
      %p498 = pneg %p158
      %p499 = pneg %p155
      %p500 = pneg %p179
      %p501 = pneg %p176
      %p502 = pneg %p200
      %p503 = pneg %p197
      %p504 = pneg %p221
      %p505 = pneg %p218
      %p506 = pneg %p242
      %p507 = pneg %p239
      %p508 = pneg %p263
      %p509 = pneg %p260
      %p510 = pneg %p284
      %p511 = pneg %p281
      %p512 = pneg %p305
      %p513 = pneg %p302
      %p514 = pneg %p326
      %p515 = pneg %p323
      %p516 = pneg %p347
      %p517 = pneg %p344
      %p518 = pneg %p368
      %p519 = pneg %p365
      %p520 = pneg %p394
      %p521 = pneg %p391
      %p522 = scmp.lt.s32.totalorder %s27, 3
      %s523 = scalar_select %p522, %s27, 3
      %s524 = smul.addr %s523, 8
      %s525 = scalar_lea.vmem %s16, %s524
      %p526 = scmp.lt.s32.totalorder %s27, 3
      %s527 = scalar_select %p526, %s27, 3
      %s528 = smul.addr %s527, 8
      %s529 = smul.addr %s528, 4
      %s530 = scalar_lea.vmem %s0, %s529
      %p531 = scmp.lt.s32.totalorder %s27, 3
      %s532 = scalar_select %p531, %s27, 3
      %s533 = smul.addr %s532, 8
      %s534 = smul.addr %s533, 4
      %s535 = scalar_lea.vmem %s1, %s534
      %p536 = scmp.lt.s32.totalorder %s27, 3
      %s537 = scalar_select %p536, %s27, 3
      %s538 = smul.addr %s537, 8
      %s539 = scalar_lea.vmem %s16, %s538
      %v541 = vld [vmem:[%s530] sm:$0xf]
      %v542 = vld [vmem:[%s530 + $0x4] sm:$0xf]
      %v543 = vld [vmem:[%s530 + $0x8] sm:$0xf]
      %v544 = vld [vmem:[%s530 + $0xc] sm:$0xf]
      %v545 = vld [vmem:[%s530 + $0x10] sm:$0xf]
      %v546 = vld [vmem:[%s530 + $0x14] sm:$0xf]
      %v547 = vld [vmem:[%s530 + $0x18] sm:$0xf]
      %v548 = vld [vmem:[%s530 + $0x1c] sm:$0xf]
      %v549 = vld [vmem:[%s2] sm:$0x3]
      %v558 = vunpack.c.l.b16 %v541
      %v559 = vunpack.c.l.b16 %v542
      %v560 = vunpack.c.l.b16 %v543
      %v561 = vunpack.c.l.b16 %v544
      %v562 = vunpack.c.l.b16 %v545
      %v563 = vunpack.c.l.b16 %v546
      %v564 = vunpack.c.l.b16 %v547
      %v565 = vunpack.c.l.b16 %v548
      %v566 = vpack.c.b16 %v559, %v558
      %v567 = vpack.c.b16 %v561, %v560
      %v568 = vpack.c.b16 %v563, %v562
      %v569 = vpack.c.b16 %v565, %v564
      %vm570 = vcmask 23552
      %v572 = vsel %vm570, %v566, 0
      %v575 = vsel %vm570, %v567, 0
      %v578 = vsel %vm570, %v568, 0
      %v581 = vsel %vm570, %v569, 0
      %vm583 = vcmask 1040384
      %vm584 = vcmask 1041408
      %v585 = vsel %vm583, 4294967295, 65535
      %v586 = vsel %vm584, %v585, 0
      %v588 = vand.u32 %v549, %v586
      %590 = vmatpush.bf16.msra.mxu0 0
      %591 = vmatpush.bf16.msra.mxu0 0
      %592 = vmatpush.bf16.msra.mxu0 0
      %593 = vmatpush.bf16.msra.mxu0 0
      %594 = vmatpush.bf16.msra.mxu0 0
      %595 = vmatpush.bf16.msra.mxu0 0
      %596 = vmatpush.bf16.msra.mxu0 0
      %597 = vmatpush.bf16.msra.mxu0 %v588
      %598 = vmatmul.bf16.gmra.mxu0 %v572
      %v599 = vpop.f32.mrf.mxu0
      %v600 = vadd.f32 0.0, %v599
      %v601 = vpop.f32.mrf.mxu0
      %v602 = vadd.f32 0.0, %v601
      %603 = vmatmul.bf16.gmra.mxu0 %v575
      %v604 = vpop.f32.mrf.mxu0
      %v605 = vadd.f32 0.0, %v604
      %v606 = vpop.f32.mrf.mxu0
      %v607 = vadd.f32 0.0, %v606
      %608 = vmatmul.bf16.gmra.mxu0 %v578
      %v609 = vpop.f32.mrf.mxu0
      %v610 = vadd.f32 0.0, %v609
      %v611 = vpop.f32.mrf.mxu0
      %v612 = vadd.f32 0.0, %v611
      %613 = vmatmul.bf16.gmra.mxu0 %v581
      %v614 = vpop.f32.mrf.mxu0
      %v615 = vadd.f32 0.0, %v614
      %v616 = vpop.f32.mrf.mxu0
      %v617 = vadd.f32 0.0, %v616
      %618 = vdwg.mxu0
      %v619 = vld [vmem:[%s535] sm:$0xf]
      %v620 = vld [vmem:[%s535 + $0x4] sm:$0xf]
      %v621 = vld [vmem:[%s535 + $0x8] sm:$0xf]
      %v622 = vld [vmem:[%s535 + $0xc] sm:$0xf]
      %v623 = vld [vmem:[%s535 + $0x10] sm:$0xf]
      %v624 = vld [vmem:[%s535 + $0x14] sm:$0xf]
      %v625 = vld [vmem:[%s535 + $0x18] sm:$0xf]
      %v626 = vld [vmem:[%s535 + $0x1c] sm:$0xf]
      %v635 = vunpack.c.l.b16 %v619
      %v636 = vunpack.c.l.b16 %v620
      %v637 = vunpack.c.l.b16 %v621
      %v638 = vunpack.c.l.b16 %v622
      %v639 = vunpack.c.l.b16 %v623
      %v640 = vunpack.c.l.b16 %v624
      %v641 = vunpack.c.l.b16 %v625
      %v642 = vunpack.c.l.b16 %v626
      %v643 = vpack.c.b16 %v636, %v635
      %v644 = vpack.c.b16 %v638, %v637
      %v645 = vpack.c.b16 %v640, %v639
      %v646 = vpack.c.b16 %v642, %v641
      %v648 = vsel %vm570, %v643, 0
      %v651 = vsel %vm570, %v644, 0
      %v654 = vsel %vm570, %v645, 0
      %v657 = vsel %vm570, %v646, 0
      %659 = vmatpush.bf16.msra.mxu0 0
      %660 = vmatpush.bf16.msra.mxu0 0
      %661 = vmatpush.bf16.msra.mxu0 0
      %662 = vmatpush.bf16.msra.mxu0 0
      %663 = vmatpush.bf16.msra.mxu0 0
      %664 = vmatpush.bf16.msra.mxu0 0
      %665 = vmatpush.bf16.msra.mxu0 0
      %666 = vmatpush.bf16.msra.mxu0 %v588
      %667 = vmatmul.bf16.gmra.mxu0 %v648
      %v668 = vpop.f32.mrf.mxu0
      %v669 = vadd.f32 0.0, %v668
      %v670 = vpop.f32.mrf.mxu0
      %v671 = vadd.f32 0.0, %v670
      %672 = vmatmul.bf16.gmra.mxu0 %v651
      %v673 = vpop.f32.mrf.mxu0
      %v674 = vadd.f32 0.0, %v673
      %v675 = vpop.f32.mrf.mxu0
      %v676 = vadd.f32 0.0, %v675
      %677 = vmatmul.bf16.gmra.mxu0 %v654
      %v678 = vpop.f32.mrf.mxu0
      %v679 = vadd.f32 0.0, %v678
      %v680 = vpop.f32.mrf.mxu0
      %v681 = vadd.f32 0.0, %v680
      %682 = vmatmul.bf16.gmra.mxu0 %v657
      %v683 = vpop.f32.mrf.mxu0
      %v684 = vadd.f32 0.0, %v683
      %v685 = vpop.f32.mrf.mxu0
      %v686 = vadd.f32 0.0, %v685
      %687 = vdwg.mxu0
      %v688 = vmax.f32 %v600, %v669
      %v689 = vmax.f32 %v602, %v671
      %v690 = vmax.f32 %v605, %v674
      %v691 = vmax.f32 %v607, %v676
      %v692 = vmax.f32 %v610, %v679
      %v693 = vmax.f32 %v612, %v681
      %v694 = vmax.f32 %v615, %v684
      %v695 = vmax.f32 %v617, %v686
      %v696 = vld [vmem:[%s3] sm:$0x1]
      %v698 = vperm.slane %v696, 0
      %v700 = vadd.f32 %v688, %v698
      %v701 = vadd.f32 %v689, %v698
      %v702 = vadd.f32 %v690, %v698
      %v703 = vadd.f32 %v691, %v698
      %v704 = vadd.f32 %v692, %v698
      %v705 = vadd.f32 %v693, %v698
      %v706 = vadd.f32 %v694, %v698
      %v707 = vadd.f32 %v695, %v698
      %v708 = vmax.f32 %v700, 0.0
      %v709 = vmax.f32 %v701, 0.0
      %v710 = vmax.f32 %v702, 0.0
      %v711 = vmax.f32 %v703, 0.0
      %v712 = vmax.f32 %v704, 0.0
      %v713 = vmax.f32 %v705, 0.0
      %v714 = vmax.f32 %v706, 0.0
      %v715 = vmax.f32 %v707, 0.0
      %vm716 = vcmask 261120
      %717 = vst.msk [vmem:[#allocation2] sm:$0xff] %vm716, 0.0
      %718 = vst.msk [vmem:[#allocation2 + $0x48] sm:$0xff] %vm716, 0.0
      %719 = vst.msk [vmem:[#allocation2 + $0x8] sm:$0xff] %vm716, %v708
      %720 = vst.msk [vmem:[#allocation2 + $0x10] sm:$0xff] %vm716, %v709
      %721 = vst.msk [vmem:[#allocation2 + $0x18] sm:$0xff] %vm716, %v710
      %722 = vst.msk [vmem:[#allocation2 + $0x20] sm:$0xff] %vm716, %v711
      %723 = vst.msk [vmem:[#allocation2 + $0x28] sm:$0xff] %vm716, %v712
      %724 = vst.msk [vmem:[#allocation2 + $0x30] sm:$0xff] %vm716, %v713
      %725 = vst.msk [vmem:[#allocation2 + $0x38] sm:$0xff] %vm716, %v714
      %726 = vst.msk [vmem:[#allocation2 + $0x40] sm:$0xff] %vm716, %v715
      %v727 = vld [vmem:[#allocation2] sm:$0xff]
      %v728 = vld [vmem:[#allocation2 + $0x8] sm:$0xff]
      %v729 = vld [vmem:[#allocation2 + $0x10] sm:$0xff]
      %v730 = vld [vmem:[#allocation2 + $0x18] sm:$0xff]
      %v731 = vld [vmem:[#allocation2 + $0x20] sm:$0xff]
      %v732 = vld [vmem:[#allocation2 + $0x28] sm:$0xff]
      %v733 = vld [vmem:[#allocation2 + $0x30] sm:$0xff]
      %v734 = vld [vmem:[#allocation2 + $0x38] sm:$0xff]
      %v735 = vld [vmem:[#allocation2 + $0x40] sm:$0xff]
      %v736 = vld [vmem:[#allocation2 + $0x48] sm:$0xff]
      %745 = vrot.lane.b32.xlu0 %v728, 32
      %v746 = vpop.permute.xlu0 %745
      %747 = vrot.lane.b32.xlu0 %v729, 32
      %v748 = vpop.permute.xlu0 %747
      %749 = vrot.lane.b32.xlu0 %v730, 32
      %v750 = vpop.permute.xlu0 %749
      %751 = vrot.lane.b32.xlu0 %v731, 32
      %v752 = vpop.permute.xlu0 %751
      %753 = vrot.lane.b32.xlu0 %v732, 32
      %v754 = vpop.permute.xlu0 %753
      %755 = vrot.lane.b32.xlu0 %v733, 32
      %v756 = vpop.permute.xlu0 %755
      %757 = vrot.lane.b32.xlu0 %v734, 32
      %v758 = vpop.permute.xlu0 %757
      %759 = vrot.lane.b32.xlu0 %v735, 32
      %v760 = vpop.permute.xlu0 %759
      %770 = vrot.lane.b32.xlu0 %v729, 64
      %v771 = vpop.permute.xlu0 %770
      %772 = vrot.lane.b32.xlu0 %v730, 64
      %v773 = vpop.permute.xlu0 %772
      %774 = vrot.lane.b32.xlu0 %v731, 64
      %v775 = vpop.permute.xlu0 %774
      %776 = vrot.lane.b32.xlu0 %v732, 64
      %v777 = vpop.permute.xlu0 %776
      %778 = vrot.lane.b32.xlu0 %v733, 64
      %v779 = vpop.permute.xlu0 %778
      %780 = vrot.lane.b32.xlu0 %v734, 64
      %v781 = vpop.permute.xlu0 %780
      %782 = vrot.lane.b32.xlu0 %v735, 64
      %v783 = vpop.permute.xlu0 %782
      %784 = vrot.lane.b32.xlu0 %v736, 64
      %v785 = vpop.permute.xlu0 %784
      %v794 = vsel %vm716, %v727, %v746
      %v795 = vsel %vm716, %v728, %v748
      %v796 = vsel %vm716, %v729, %v750
      %v797 = vsel %vm716, %v730, %v752
      %v798 = vsel %vm716, %v731, %v754
      %v799 = vsel %vm716, %v732, %v756
      %v800 = vsel %vm716, %v733, %v758
      %v801 = vsel %vm716, %v734, %v760
      %vm802 = vcmask 523264
      %v803 = vsel %vm802, %v794, %v771
      %v804 = vsel %vm802, %v795, %v773
      %v805 = vsel %vm802, %v796, %v775
      %v806 = vsel %vm802, %v797, %v777
      %v807 = vsel %vm802, %v798, %v779
      %v808 = vsel %vm802, %v799, %v781
      %v809 = vsel %vm802, %v800, %v783
      %v810 = vsel %vm802, %v801, %v785
      %v811 = vpack.c.bf16 %v804, %v803
      %v812 = vpack.c.bf16 %v806, %v805
      %v813 = vpack.c.bf16 %v808, %v807
      %v814 = vpack.c.bf16 %v810, %v809
      %v815 = vld [vmem:[%s4] sm:$0xf]
      %v816 = vld [vmem:[%s4 + $0x4] sm:$0xf]
      %v817 = vld [vmem:[%s4 + $0x8] sm:$0xf]
      %v818 = vld [vmem:[%s4 + $0xc] sm:$0xf]
      %v819 = vld [vmem:[%s4 + $0x10] sm:$0xf]
      %v820 = vld [vmem:[%s4 + $0x14] sm:$0xf]
      %v821 = vld [vmem:[%s4 + $0x18] sm:$0xf]
      %v822 = vld [vmem:[%s4 + $0x1c] sm:$0xf]
      %v823 = vld [vmem:[%s4 + $0x20] sm:$0xf]
      %v824 = vld [vmem:[%s4 + $0x24] sm:$0xf]
      %v825 = vld [vmem:[%s4 + $0x28] sm:$0xf]
      %v826 = vld [vmem:[%s4 + $0x2c] sm:$0xf]
      %v827 = vld [vmem:[%s5] sm:$0x1]
      %v829 = vperm.slane %v827, 0
      %v843 = vunpack.c.l.b16 %v815
      %v844 = vunpack.c.l.b16 %v816
      %v845 = vunpack.c.l.b16 %v817
      %v846 = vunpack.c.l.b16 %v818
      %v847 = vunpack.c.l.b16 %v819
      %v848 = vunpack.c.l.b16 %v820
      %v849 = vunpack.c.l.b16 %v821
      %v850 = vunpack.c.l.b16 %v822
      %v851 = vunpack.c.l.b16 %v823
      %v852 = vunpack.c.l.b16 %v824
      %v853 = vunpack.c.l.b16 %v825
      %v854 = vunpack.c.l.b16 %v826
      %v855 = vpack.c.b16 %v844, %v843
      %v856 = vpack.c.b16 %v846, %v845
      %v857 = vpack.c.b16 %v848, %v847
      %v858 = vpack.c.b16 %v850, %v849
      %v859 = vpack.c.b16 %v852, %v851
      %v860 = vpack.c.b16 %v854, %v853
      %vm867 = vcmask 785408
      %v869 = vsel %vm867, %v811, 0
      %v872 = vsel %vm867, %v812, 0
      %v875 = vsel %vm867, %v813, 0
      %v878 = vsel %vm867, %v814, 0
      %880 = vmatpush.bf16.msra.mxu0 0
      %881 = vmatpush.bf16.msra.mxu0 0
      %882 = vmatpush.bf16.msra.mxu0 %v860
      %883 = vmatpush.bf16.msra.mxu0 %v859
      %884 = vmatpush.bf16.msra.mxu0 %v858
      %885 = vmatpush.bf16.msra.mxu0 %v857
      %886 = vmatpush.bf16.msra.mxu0 %v856
      %887 = vmatpush.bf16.msra.mxu0 %v855
      %888 = vmatmul.bf16.gmra.mxu0 %v869
      %v889 = vpop.f32.mrf.mxu0
      %v890 = vadd.f32 %v829, %v889
      %v891 = vpop.f32.mrf.mxu0
      %v892 = vadd.f32 %v829, %v891
      %893 = vmatmul.bf16.gmra.mxu0 %v872
      %v894 = vpop.f32.mrf.mxu0
      %v895 = vadd.f32 %v829, %v894
      %v896 = vpop.f32.mrf.mxu0
      %v897 = vadd.f32 %v829, %v896
      %898 = vmatmul.bf16.gmra.mxu0 %v875
      %v899 = vpop.f32.mrf.mxu0
      %v900 = vadd.f32 %v829, %v899
      %v901 = vpop.f32.mrf.mxu0
      %v902 = vadd.f32 %v829, %v901
      %903 = vmatmul.bf16.gmra.mxu0 %v878
      %v904 = vpop.f32.mrf.mxu0
      %v905 = vadd.f32 %v829, %v904
      %v906 = vpop.f32.mrf.mxu0
      %v907 = vadd.f32 %v829, %v906
      %908 = vdwg.mxu0
      %v909 = vmax.f32 %v890, 0.0
      %v910 = vmax.f32 %v892, 0.0
      %v911 = vmax.f32 %v895, 0.0
      %v912 = vmax.f32 %v897, 0.0
      %v913 = vmax.f32 %v900, 0.0
      %v914 = vmax.f32 %v902, 0.0
      %v915 = vmax.f32 %v905, 0.0
      %v916 = vmax.f32 %v907, 0.0
      %v917 = vmax.f32 %v909, %v910
      %v918 = vmax.f32 %v911, %v912
      %v919 = vmax.f32 %v913, %v914
      %v920 = vmax.f32 %v915, %v916
      %922 = vrot.lane.b32.xlu0 %v918, 64
      %v923 = vpop.permute.xlu0 %922
      %926 = vrot.lane.b32.xlu0 %v920, 64
      %v927 = vpop.permute.xlu0 %926
      %v929 = vsel %vm802, %v917, %v923
      %v930 = vsel %vm802, %v919, %v927
      %v931 = vpack.c.bf16 %v929, %v929
      %v932 = vpack.c.bf16 %v930, %v930
      %v933 = vld [vmem:[%s6] sm:$0xf]
      %v934 = vld [vmem:[%s6 + $0x4] sm:$0xf]
      %v935 = vld [vmem:[%s6 + $0x8] sm:$0xf]
      %v936 = vld [vmem:[%s6 + $0xc] sm:$0xf]
      %v937 = vld [vmem:[%s6 + $0x10] sm:$0xf]
      %v938 = vld [vmem:[%s6 + $0x14] sm:$0xf]
      %v939 = vld [vmem:[%s6 + $0x18] sm:$0xf]
      %v940 = vld [vmem:[%s6 + $0x1c] sm:$0xf]
      %v941 = vld [vmem:[%s6 + $0x20] sm:$0xf]
      %v942 = vld [vmem:[%s6 + $0x24] sm:$0xf]
      %v943 = vld [vmem:[%s6 + $0x28] sm:$0xf]
      %v944 = vld [vmem:[%s6 + $0x2c] sm:$0xf]
      %v945 = vld [vmem:[%s6 + $0x30] sm:$0xf]
      %v946 = vld [vmem:[%s6 + $0x34] sm:$0xf]
      %v947 = vld [vmem:[%s6 + $0x38] sm:$0xf]
      %v948 = vld [vmem:[%s6 + $0x3c] sm:$0xf]
      %v949 = vld [vmem:[%s6 + $0x40] sm:$0xf]
      %v950 = vld [vmem:[%s6 + $0x44] sm:$0xf]
      %v951 = vld [vmem:[%s6 + $0x48] sm:$0xf]
      %v952 = vld [vmem:[%s6 + $0x4c] sm:$0xf]
      %v953 = vld [vmem:[%s6 + $0x50] sm:$0xf]
      %v954 = vld [vmem:[%s6 + $0x54] sm:$0xf]
      %v955 = vld [vmem:[%s6 + $0x58] sm:$0xf]
      %v956 = vld [vmem:[%s6 + $0x5c] sm:$0xf]
      %v957 = vld [vmem:[%s6 + $0x60] sm:$0xf]
      %v958 = vld [vmem:[%s6 + $0x64] sm:$0xf]
      %v959 = vld [vmem:[%s6 + $0x68] sm:$0xf]
      %v960 = vld [vmem:[%s6 + $0x6c] sm:$0xf]
      %v961 = vld [vmem:[%s6 + $0x70] sm:$0xf]
      %v962 = vld [vmem:[%s6 + $0x74] sm:$0xf]
      %v963 = vld [vmem:[%s6 + $0x78] sm:$0xf]
      %v964 = vld [vmem:[%s6 + $0x7c] sm:$0xf]
      %v965 = vld [vmem:[%s7] sm:$0x1]
      %v967 = vperm.slane %v965, 0
      %v1001 = vunpack.c.l.b16 %v933
      %v1002 = vunpack.c.l.b16 %v934
      %v1003 = vunpack.c.l.b16 %v935
      %v1004 = vunpack.c.l.b16 %v936
      %v1005 = vunpack.c.l.b16 %v937
      %v1006 = vunpack.c.l.b16 %v938
      %v1007 = vunpack.c.l.b16 %v939
      %v1008 = vunpack.c.l.b16 %v940
      %v1009 = vunpack.c.l.b16 %v941
      %v1010 = vunpack.c.l.b16 %v942
      %v1011 = vunpack.c.l.b16 %v943
      %v1012 = vunpack.c.l.b16 %v944
      %v1013 = vunpack.c.l.b16 %v945
      %v1014 = vunpack.c.l.b16 %v946
      %v1015 = vunpack.c.l.b16 %v947
      %v1016 = vunpack.c.l.b16 %v948
      %v1017 = vunpack.c.l.b16 %v949
      %v1018 = vunpack.c.l.b16 %v950
      %v1019 = vunpack.c.l.b16 %v951
      %v1020 = vunpack.c.l.b16 %v952
      %v1021 = vunpack.c.l.b16 %v953
      %v1022 = vunpack.c.l.b16 %v954
      %v1023 = vunpack.c.l.b16 %v955
      %v1024 = vunpack.c.l.b16 %v956
      %v1025 = vunpack.c.l.b16 %v957
      %v1026 = vunpack.c.l.b16 %v958
      %v1027 = vunpack.c.l.b16 %v959
      %v1028 = vunpack.c.l.b16 %v960
      %v1029 = vunpack.c.l.b16 %v961
      %v1030 = vunpack.c.l.b16 %v962
      %v1031 = vunpack.c.l.b16 %v963
      %v1032 = vunpack.c.l.b16 %v964
      %v1033 = vpack.c.b16 %v1002, %v1001
      %v1034 = vpack.c.b16 %v1004, %v1003
      %v1035 = vpack.c.b16 %v1006, %v1005
      %v1036 = vpack.c.b16 %v1008, %v1007
      %v1037 = vpack.c.b16 %v1010, %v1009
      %v1038 = vpack.c.b16 %v1012, %v1011
      %v1039 = vpack.c.b16 %v1014, %v1013
      %v1040 = vpack.c.b16 %v1016, %v1015
      %v1041 = vpack.c.b16 %v1018, %v1017
      %v1042 = vpack.c.b16 %v1020, %v1019
      %v1043 = vpack.c.b16 %v1022, %v1021
      %v1044 = vpack.c.b16 %v1024, %v1023
      %v1045 = vpack.c.b16 %v1026, %v1025
      %v1046 = vpack.c.b16 %v1028, %v1027
      %v1047 = vpack.c.b16 %v1030, %v1029
      %v1048 = vpack.c.b16 %v1032, %v1031
      %1065 = vmatpush.bf16.msra.mxu0 %v1040
      %1066 = vmatpush.bf16.msra.mxu0 %v1039
      %1067 = vmatpush.bf16.msra.mxu0 %v1038
      %1068 = vmatpush.bf16.msra.mxu0 %v1037
      %1069 = vmatpush.bf16.msra.mxu0 %v1036
      %1070 = vmatpush.bf16.msra.mxu0 %v1035
      %1071 = vmatpush.bf16.msra.mxu0 %v1034
      %1072 = vmatpush.bf16.msra.mxu0 %v1033
      %1073 = vmatmul.bf16.gmra.mxu0 %v931
      %v1074 = vpop.f32.mrf.mxu0
      %v1075 = vadd.f32 %v967, %v1074
      %v1076 = vpop.f32.mrf.mxu0
      %1077 = vdwg.mxu0
      %1078 = vmatpush.bf16.msra.mxu0 %v1048
      %1079 = vmatpush.bf16.msra.mxu0 %v1047
      %1080 = vmatpush.bf16.msra.mxu0 %v1046
      %1081 = vmatpush.bf16.msra.mxu0 %v1045
      %1082 = vmatpush.bf16.msra.mxu0 %v1044
      %1083 = vmatpush.bf16.msra.mxu0 %v1043
      %1084 = vmatpush.bf16.msra.mxu0 %v1042
      %1085 = vmatpush.bf16.msra.mxu0 %v1041
      %1086 = vmatmul.bf16.gmra.mxu0 %v932
      %v1087 = vpop.f32.mrf.mxu0
      %v1088 = vadd.f32 %v1075, %v1087
      %v1089 = vpop.f32.mrf.mxu0
      %1090 = vdwg.mxu0
      %v1091 = vmax.f32 %v1088, 0.0
      %v1092 = vpack.c.bf16 %v1091, %v1091
      %v1093 = vld [vmem:[%s8] sm:$0xf]
      %v1094 = vld [vmem:[%s8 + $0x4] sm:$0xf]
      %v1095 = vld [vmem:[%s8 + $0x8] sm:$0xf]
      %v1096 = vld [vmem:[%s8 + $0xc] sm:$0xf]
      %v1097 = vld [vmem:[%s9] sm:$0x1]
      %v1099 = vperm.slane %v1097, 0
      %v1105 = vunpack.c.l.b16 %v1093
      %v1106 = vunpack.c.l.b16 %v1094
      %v1107 = vunpack.c.l.b16 %v1095
      %v1108 = vunpack.c.l.b16 %v1096
      %v1109 = vpack.c.b16 %v1106, %v1105
      %v1110 = vpack.c.b16 %v1108, %v1107
      %v1114 = vsel %vm716, %v1092, 0
      %1116 = vmatpush.bf16.msra.mxu0 0
      %1117 = vmatpush.bf16.msra.mxu0 0
      %1118 = vmatpush.bf16.msra.mxu0 0
      %1119 = vmatpush.bf16.msra.mxu0 0
      %1120 = vmatpush.bf16.msra.mxu0 0
      %1121 = vmatpush.bf16.msra.mxu0 0
      %1122 = vmatpush.bf16.msra.mxu0 %v1110
      %1123 = vmatpush.bf16.msra.mxu0 %v1109
      %1124 = vmatmul.bf16.gmra.mxu0 %v1114
      %v1125 = vpop.f32.mrf.mxu0
      %v1126 = vadd.f32 %v1099, %v1125
      %v1127 = vpop.f32.mrf.mxu0
      %1128 = vdwg.mxu0
      %v1129 = vld [vmem:[%s10] sm:$0xf]
      %v1130 = vld [vmem:[%s10 + $0x4] sm:$0xf]
      %v1131 = vld [vmem:[%s10 + $0x8] sm:$0xf]
      %v1132 = vld [vmem:[%s10 + $0xc] sm:$0xf]
      %v1133 = vld [vmem:[%s11] sm:$0x1]
      %v1135 = vperm.slane %v1133, 0
      %v1141 = vunpack.c.l.b16 %v1129
      %v1142 = vunpack.c.l.b16 %v1130
      %v1143 = vunpack.c.l.b16 %v1131
      %v1144 = vunpack.c.l.b16 %v1132
      %v1145 = vpack.c.b16 %v1142, %v1141
      %v1146 = vpack.c.b16 %v1144, %v1143
      %1149 = vmatpush.bf16.msra.mxu0 0
      %1150 = vmatpush.bf16.msra.mxu0 0
      %1151 = vmatpush.bf16.msra.mxu0 0
      %1152 = vmatpush.bf16.msra.mxu0 0
      %1153 = vmatpush.bf16.msra.mxu0 0
      %1154 = vmatpush.bf16.msra.mxu0 0
      %1155 = vmatpush.bf16.msra.mxu0 %v1146
      %1156 = vmatpush.bf16.msra.mxu0 %v1145
      %1157 = vmatmul.bf16.gmra.mxu0 %v1114
      %v1158 = vpop.f32.mrf.mxu0
      %v1159 = vadd.f32 %v1135, %v1158
      %v1160 = vpop.f32.mrf.mxu0
      %1161 = vdwg.mxu0
      %v1162 = vld [vmem:[%s12] sm:$0xf]
      %v1163 = vld [vmem:[%s12 + $0x4] sm:$0xf]
      %v1164 = vld [vmem:[%s12 + $0x8] sm:$0xf]
      %v1165 = vld [vmem:[%s12 + $0xc] sm:$0xf]
      %v1166 = vld [vmem:[%s13] sm:$0x1]
      %v1168 = vperm.slane %v1166, 0
      %v1174 = vunpack.c.l.b16 %v1162
      %v1175 = vunpack.c.l.b16 %v1163
      %v1176 = vunpack.c.l.b16 %v1164
      %v1177 = vunpack.c.l.b16 %v1165
      %v1178 = vpack.c.b16 %v1175, %v1174
      %v1179 = vpack.c.b16 %v1177, %v1176
      %1182 = vmatpush.bf16.msra.mxu0 0
      %1183 = vmatpush.bf16.msra.mxu0 0
      %1184 = vmatpush.bf16.msra.mxu0 0
      %1185 = vmatpush.bf16.msra.mxu0 0
      %1186 = vmatpush.bf16.msra.mxu0 0
      %1187 = vmatpush.bf16.msra.mxu0 0
      %1188 = vmatpush.bf16.msra.mxu0 %v1179
      %1189 = vmatpush.bf16.msra.mxu0 %v1178
      %1190 = vmatmul.bf16.gmra.mxu0 %v1114
      %v1191 = vpop.f32.mrf.mxu0
      %v1192 = vadd.f32 %v1168, %v1191
      %v1193 = vpop.f32.mrf.mxu0
      %1194 = vdwg.mxu0
      %v1196 = vsel %vm716, %v1126, 0
      %v1199 = vsel %vm716, %v1159, 0
      %1201 = vmatpush.xpose.msra.mxu0 0.0
      %1202 = vmatpush.xpose.msra.mxu0 0.0
      %1203 = vmatpush.xpose.msra.mxu0 0.0
      %1204 = vmatpush.xpose.msra.mxu0 0.0
      %1205 = vmatpush.xpose.msra.mxu0 0.0
      %1206 = vmatpush.xpose.msra.mxu0 0.0
      %1207 = vmatpush.xpose.msra.mxu0 0.0
      %1208 = vmatpush.xpose.msra.mxu0 0.0
      %1209 = vmatpush.xpose.msra.mxu0 0.0
      %1210 = vmatpush.xpose.msra.mxu0 0.0
      %1211 = vmatpush.xpose.msra.mxu0 0.0
      %1212 = vmatpush.xpose.msra.mxu0 0.0
      %1213 = vmatpush.xpose.msra.mxu0 0.0
      %1214 = vmatpush.xpose.msra.mxu0 0.0
      %1215 = vmatpush.xpose.msra.mxu0 0.0
      %1216 = vmatpush.xpose.msra.mxu0 %v1199
      %1217 = vmatmul.f32.gmra.mxu0 %v1196
      %v1218 = vpop.f32.mrf.mxu0
      %v1219 = vadd.f32 0.0, %v1218
      %1220 = vdwg.mxu0
      %v1221 = vmul.f32 %v1219, 0.17677669
      %v1222 = vlaneseq
      %v1223 = vand.u32 %v1222, 127
      %vm1224 = vcmp.lt.s32.totalorder %v1223, 2
      %v1225 = vsel %vm1224, %v1221, -1e+30
      %vm1226 = vcmask 64512
      %v1227 = vsel %vm1226, %v1225, -inf
      %1228 = vmax.xlane.f32.xlu0 %v1227
      %v1229 = vpop.xlane.xlu0 %1228
      %v1230 = vsub.f32 %v1225, %v1229
      %v1231 = vmul.f32 %v1230, 1.442695
      %v1232 = vpow.pop %v1231
      %v1233 = vsel %vm1226, %v1232, 0.0
      %1234 = vadd.xlane.f32.xlu0 %v1233
      %v1235 = vpop.xlane.xlu0 %1234
      %v1236 = vrcp.pop %v1235
      %v1237 = vmul.f32 %v1232, %v1236
      %v1239 = vsel %vm1226, %v1237, 0
      %1241 = vmatpush.msra.mxu0 0.0
      %1242 = vmatpush.msra.mxu0 0.0
      %1243 = vmatpush.msra.mxu0 0.0
      %1244 = vmatpush.msra.mxu0 0.0
      %1245 = vmatpush.msra.mxu0 0.0
      %1246 = vmatpush.msra.mxu0 0.0
      %1247 = vmatpush.msra.mxu0 0.0
      %1248 = vmatpush.msra.mxu0 0.0
      %1249 = vmatpush.msra.mxu0 0.0
      %1250 = vmatpush.msra.mxu0 0.0
      %1251 = vmatpush.msra.mxu0 0.0
      %1252 = vmatpush.msra.mxu0 0.0
      %1253 = vmatpush.msra.mxu0 0.0
      %1254 = vmatpush.msra.mxu0 0.0
      %1255 = vmatpush.msra.mxu0 0.0
      %1256 = vmatpush.msra.mxu0 %v1192
      %1257 = vmatmul.f32.gmra.mxu0 %v1239
      %v1258 = vpop.f32.mrf.mxu0
      %v1259 = vadd.f32 0.0, %v1258
      %1260 = vdwg.mxu0
      %v1261 = vpack.c.bf16 %v1259, %v1259
      %v1262 = vld [vmem:[%s14] sm:$0xf]
      %v1263 = vld [vmem:[%s14 + $0x4] sm:$0xf]
      %v1264 = vld [vmem:[%s14 + $0x8] sm:$0xf]
      %v1265 = vld [vmem:[%s14 + $0xc] sm:$0xf]
      %v1266 = vld [vmem:[%s15] sm:$0x1]
      %v1268 = vperm.slane %v1266, 0
      %v1274 = vunpack.c.l.b16 %v1262
      %v1275 = vunpack.c.l.b16 %v1263
      %v1276 = vunpack.c.l.b16 %v1264
      %v1277 = vunpack.c.l.b16 %v1265
      %v1278 = vpack.c.b16 %v1275, %v1274
      %v1279 = vpack.c.b16 %v1277, %v1276
      %v1283 = vsel %vm716, %v1261, 0
      %1285 = vmatpush.bf16.msra.mxu0 0
      %1286 = vmatpush.bf16.msra.mxu0 0
      %1287 = vmatpush.bf16.msra.mxu0 0
      %1288 = vmatpush.bf16.msra.mxu0 0
      %1289 = vmatpush.bf16.msra.mxu0 0
      %1290 = vmatpush.bf16.msra.mxu0 0
      %1291 = vmatpush.bf16.msra.mxu0 %v1279
      %1292 = vmatpush.bf16.msra.mxu0 %v1278
      %1293 = vmatmul.bf16.gmra.mxu0 %v1283
      %v1294 = vpop.f32.mrf.mxu0
      %v1295 = vadd.f32 %v1268, %v1294
      %v1296 = vpop.f32.mrf.mxu0
      %1297 = vdwg.mxu0
      %v1298 = vsub.f32 0.0, %v1295
      %v1299 = vmul.f32 %v1298, 1.442695
      %v1300 = vpow.pop %v1299
      %v1301 = vadd.f32 %v1300, 1.0
      %v1302 = vrcp.pop %v1301
      %v1303 = vmul.f32 %v1301, %v1302
      %v1304 = vsub.f32 1.0, %v1303
      %v1305 = vmul.f32 %v1302, %v1304
      %v1306 = vadd.f32 %v1302, %v1305
      %vm1307 = vweird.f32 %v1301
      %vm1308 = vweird.f32 %v1302
      %vm1309 = vmor %vm1307, %vm1308
      %v1310 = vsel %vm1309, %v1302, %v1306
      %v1311 = vand.u32 2147483647, %v1301
      %vm1312 = vcmp.eq.f32.partialorder %v1311, 8.507059e+37
      %v1313 = vand.u32 %v1301, 2147483648
      %v1314 = vor.u32 1.1754944e-38, %v1313
      %v1315 = vsel %vm1312, %v1314, %v1310
      %v1316 = vmul.f32 1.0, %v1315
      %vm1317 = vcmask 31744
      %1318 = vst.msk [vmem:[%s539] sm:$0xff] %vm1317, %v1316
      %p1319 = scmp.lt.s32.totalorder %s27, 3
      %s1320 = scalar_select %p1319, %s27, 3
      %s1321 = smul.addr %s1320, 8
      %s1322 = scalar_lea.vmem %s16, %s1321
      // Predicated region
      $region85: #{cnn_attention_forward.1} parent=83 // pred_check
        %p1323 = pneg %p391
      $region86: #{cnn_attention_forward.1} parent=83 // pred_check_branch
        %1325 = sbr.rel (%p1323) target = $region88
      $region87: #{cnn_attention_forward.1} parent=83 // pred_region
        _
      $region88: #{cnn_attention_forward.1} parent=83 // pred_fallthru
        _
    $region84: #{cnn_attention_forward.1} parent=5 // pred_fallthru
      _
    %p1326 = scmp.le.s32.totalorder 2, %s22
    // Predicated region
    $region89: #{cnn_attention_forward.1} parent=5 // pred_check
      %p1327 = pneg %p1326
    $region90: #{cnn_attention_forward.1} parent=5 // pred_check_branch
      %1329 = sbr.rel (%p1327) target = $region92
    $region91: #{cnn_attention_forward.1} parent=5 // pred_region
      %s1330 = ssub.s32 %s22, 2
      // Predicated region
      $region93: #{cnn_attention_forward.1} parent=91 // pred_check
        %p1331 = pneg %p397
      $region94: #{cnn_attention_forward.1} parent=91 // pred_check_branch
        %1333 = sbr.rel (%p1331) target = $region96
      $region95: #{cnn_attention_forward.1} parent=91 // pred_region
        %p1334 = scmp.lt.s32.totalorder %s28, 3
        %s1335 = scalar_select %p1334, %s28, 3
        %s1336 = smul.addr %s1335, 8
        %s1337 = scalar_lea.vmem %s16, %s1336
      $region96: #{cnn_attention_forward.1} parent=91 // pred_fallthru
        _
    $region92: #{cnn_attention_forward.1} parent=5 // pred_fallthru
      _
  $region6: #{cnn_attention_forward.1} parent=0 // loop_footer
    %s26 = sadd.s32 1, %s22
  $region7: #{cnn_attention_forward.1} parent=0 // loop_footer_branch
    %21 = sbr.rel target = $region3
  $region8: #{cnn_attention_forward.1} parent=0 // loop_exit
    _

</llo_original>
